<compile_context>
chip_gen: v7x
topology: tpu7x:2x2x1
jax: 0.10.0
libtpu: 0.0.40
codegen_flags: <defaults>
</compile_context>

<pallas_src>
import jax
import jax.numpy as jnp
import numpy as np
from jax import lax
from jax.experimental import pallas as pl
from jax.experimental.pallas import tpu as pltpu

_K = 5  # Conv1d kernel size (both conv layers), padding = 2


def simplecnn_kernel(x_ref, w1_ref, b1_ref, w2_ref, b2_ref,
                     wf1_ref, bf1_ref, wf2_ref, bf2_ref, out_ref):
    tn, lp = x_ref.shape                      # (tile_n, L + 4), lane-dense f32
    L = lp - (_K - 1)
    L2, L3 = L // 2, L // 4
    C1 = w1_ref.shape[1]
    C2 = w2_ref.shape[1]

    # ---- conv1: Cin=1 -> C1, k=5, pad=2 (BN folded into w1/b1). VPU-only. ----
    # Hoisted broadcasts: x gets its channel (lane) dim once; taps pre-sliced.
    xb = jnp.broadcast_to(x_ref[...][:, :, None], (tn, lp, C1))   # (tn, L+4, C1)
    w1 = w1_ref[...]                                              # (K, C1) f32
    taps = [w1[k][None, None, :] for k in range(_K)]              # (1, 1, C1) each
    h = xb[:, 0:L, :] * taps[0]
    for k in range(1, _K):
        h = h + xb[:, k:k + L, :] * taps[k]                       # (tn, L, C1)
    h = jnp.maximum(h + b1_ref[...], 0.0)
    # MaxPool1d(2): reshape + pairwise max (L even by construction).
    h = h.reshape(tn, L2, 2, C1).max(axis=2)                      # (tn, L2, C1)
    # TODO(synk): nn.Dropout layers are identity in eval/inference mode; not applied.

    # ---- conv2: C1 -> C2, k=5, pad=2 -> in-register im2col + ONE bf16 MXU dot ----
    # No VMEM scratch round trip: two zero boundary rows are concatenated in
    # registers, then the 5 shifted windows form the K*C1 contraction.
    zb = jnp.zeros((tn, 2, C1), jnp.float32)
    hpad = jnp.concatenate([zb, h, zb], axis=1)                   # (tn, L2+4, C1)
    xc2 = jnp.concatenate([hpad[:, k:k + L2, :] for k in range(_K)],
                          axis=-1)                                # (tn, L2, K*C1)
    h2 = jnp.dot(xc2.reshape(tn * L2, _K * C1).astype(jnp.bfloat16),
                 w2_ref[...], preferred_element_type=jnp.float32)
    h2 = jnp.maximum(h2 + b2_ref[...], 0.0)                       # (tn*L2, C2)
    h2 = h2.reshape(tn, L3, 2, C2).max(axis=2)                    # (tn, L3, C2)

    # ---- fc1: ONE bf16 MXU matmul over the full L3*C2 contraction + ReLU ----
    # (PyTorch (C, L) flatten order + BatchNorm already folded into wf1/bf1.)
    f = jnp.dot(h2.reshape(tn, L3 * C2).astype(jnp.bfloat16),
                wf1_ref[...], preferred_element_type=jnp.float32)
    f = jnp.maximum(f + bf1_ref[...], 0.0)                        # (tn, H)

    # ---- fc2 into a lane-dense (multiple-of-128) output slab ----
    out_ref[...] = jnp.dot(f.astype(jnp.bfloat16), wf2_ref[...],
                           preferred_element_type=jnp.float32) + bf2_ref[...]


def simplecnn_forward(x, p, *, tile_n=128, eps=1e-5):
    """x: (N, 1, L) float32 (PyTorch NCL).  Returns (N, n_cls) float32."""
    N, _, L = x.shape
    assert L % 4 == 0, "two MaxPool1d(2) stages assume L divisible by 4"
    L2, L3 = L // 2, L // 4
    C1 = p["W1"].shape[0]
    C2 = p["W2"].shape[0]
    H = p["WF1"].shape[0]
    n_cls = p["WF2"].shape[0]
    n_pad = pl.cdiv(n_cls, 128) * 128            # lane-dense output width

    # --- batch tiling ---------------------------------------------------------
    # Cap the tile from the lane-padded footprint of the biggest in-kernel
    # intermediates (conv activations pad 16 -> 128 lanes, f32):
    #   xb / h: ~L rows each; pooled h / xc2: ~L/2 rows each.
    per_sample_bytes = 4 * 128 * (2 * L + L2 + L2 + 4)
    tile_n = min(tile_n, max(8, (20 * (1 << 20)) // per_sample_bytes // 8 * 8))
    if N < 16:
        tn, n_padded = N, N                      # single tile (block == full array)
    else:
        # >= 2 grid steps so the second TensorCore on v7x megacore gets work.
        tn = min(tile_n, pl.cdiv(pl.cdiv(N, 2), 8) * 8)
        n_padded = pl.cdiv(N, tn) * tn

    # --- fold eval-mode BatchNorm into weights/biases; permute to kernel layouts.
    # MXU operands (w2 / wf1 / wf2) are stored bf16; the VPU conv1 path stays f32.
    s1 = p["g1"] * lax.rsqrt(p["v1"] + eps)
    w1k = jnp.transpose(p["W1"][:, 0, :], (1, 0)) * s1[None, :]              # (K, C1)
    b1k = ((p["B1"] - p["m1"]) * s1 + p["be1"]).reshape(1, C1)

    s2 = p["g2"] * lax.rsqrt(p["v2"] + eps)
    w2k = (jnp.transpose(p["W2"], (2, 1, 0)).reshape(_K * C1, C2)            # row = k*C1 + c
           * s2[None, :]).astype(jnp.bfloat16)
    b2k = ((p["B2"] - p["m2"]) * s2 + p["be2"]).reshape(1, C2)

    sf = p["gf"] * lax.rsqrt(p["vf"] + eps)
    # torch flatten index is c*L3 + l  ->  reorder rows to l*C2 + c.
    wf1k = (jnp.transpose(p["WF1"].reshape(H, C2, L3), (2, 1, 0))
            .reshape(L3 * C2, H) * sf[None, :]).astype(jnp.bfloat16)
    bf1k = ((p["BF1"] - p["mf"]) * sf + p["bef"]).reshape(1, H)

    wf2k = (jnp.zeros((H, n_pad), jnp.float32)
            .at[:, :n_cls].set(p["WF2"].T)).astype(jnp.bfloat16)             # (H, n_pad)
    bf2k = jnp.zeros((1, n_pad), jnp.float32).at[:, :n_cls].set(p["BF2"])

    # --- input: drop channel dim (2-D lane-dense), zero-pad length and batch ---
    xpad = jnp.pad(x[:, 0, :], ((0, n_padded - N), (2, 2)))                  # (Np, L+4)

    weights = (w1k, b1k, w2k, b2k, wf1k, bf1k, wf2k, bf2k)
    grid = (n_padded // tn,)
    cost = pl.CostEstimate(
        flops=2 * n_padded * (L * _K * C1 + L2 * _K * C1 * C2
                              + L3 * C2 * H + H * n_pad),
        transcendentals=0,
        bytes_accessed=int(4 * n_padded * (L + 4) + 4 * n_padded * n_pad
                           + sum(w.size * w.dtype.itemsize for w in weights)),
    )

    def call(single_buffer_weights):
        def const_spec(shape):
            zeros = (0,) * len(shape)
            if single_buffer_weights:
                # Constant index_map: weights never change across the grid,
                # so double-buffering them is pure VMEM waste.
                return pl.BlockSpec(shape, lambda *_: zeros,
                                    pipeline_mode=pl.Buffered(1))
            return pl.BlockSpec(shape, lambda *_: zeros)

        return pl.pallas_call(
            simplecnn_kernel,
            out_shape=jax.ShapeDtypeStruct((n_padded, n_pad), jnp.float32),
            grid=grid,
            in_specs=[pl.BlockSpec((tn, L + 4), lambda i: (i, 0))]   # batch-tiled acts
                     + [const_spec(w.shape) for w in weights],       # VMEM-resident
            out_specs=pl.BlockSpec((tn, n_pad), lambda i: (i, 0)),
            compiler_params=pltpu.CompilerParams(
                dimension_semantics=("parallel",),       # batch axis -> megacore
                vmem_limit_bytes=48 * 1024 * 1024),      # > 16/32 MiB defaults, < v7x 64 MiB
            cost_estimate=cost,
        )(xpad, *weights)

    try:
        out = call(True)
    except Exception:
        # pipeline_mode=pl.Buffered(1) not supported on this jax version/path:
        # fall back to default (double-buffered) weight blocks.
        out = call(False)
    return out[:N, :n_cls]


def reference_forward(x, p, eps=1e-5):
    """Pure-JAX reference mirroring the PyTorch module (eval mode) in NCL layout."""
    def bn_ncl(h, g, b, m, v):
        return (h - m[None, :, None]) * (g[None, :, None] / jnp.sqrt(v[None, :, None] + eps)) \
               + b[None, :, None]

    h = lax.conv_general_dilated(x, p["W1"], (1,), [(2, 2)],
                                 dimension_numbers=("NCH", "OIH", "NCH")) + p["B1"][None, :, None]
    h = jnp.maximum(bn_ncl(h, p["g1"], p["be1"], p["m1"], p["v1"]), 0.0)
    N, C, L = h.shape
    h = h.reshape(N, C, L // 2, 2).max(-1)
    h = lax.conv_general_dilated(h, p["W2"], (1,), [(2, 2)],
                                 dimension_numbers=("NCH", "OIH", "NCH")) + p["B2"][None, :, None]
    h = jnp.maximum(bn_ncl(h, p["g2"], p["be2"], p["m2"], p["v2"]), 0.0)
    N, C, L = h.shape
    h = h.reshape(N, C, L // 2, 2).max(-1)
    f = h.reshape(N, -1) @ p["WF1"].T + p["BF1"]
    f = (f - p["mf"]) * (p["gf"] / jnp.sqrt(p["vf"] + eps)) + p["bef"]
    f = jnp.maximum(f, 0.0)
    return f @ p["WF2"].T + p["BF2"]


def init_params(key, n_cls, in_dim):
    ks = iter(jax.random.split(key, 32))
    nrm = lambda shape, s=0.1: s * jax.random.normal(next(ks), shape, jnp.float32)
    pos = lambda shape: 0.5 + jax.random.uniform(next(ks), shape, dtype=jnp.float32)
    conv_out = 32 * (in_dim // 4)
    return dict(
        W1=nrm((16, 1, 5)), B1=nrm((16,)),
        g1=1.0 + nrm((16,)), be1=nrm((16,)), m1=nrm((16,)), v1=pos((16,)),
        W2=nrm((32, 16, 5)), B2=nrm((32,)),
        g2=1.0 + nrm((32,)), be2=nrm((32,)), m2=nrm((32,)), v2=pos((32,)),
        WF1=nrm((128, conv_out)), BF1=nrm((128,)),
        gf=1.0 + nrm((128,)), bef=nrm((128,)), mf=nrm((128,)), vf=pos((128,)),
        WF2=nrm((n_cls, 128)), BF2=nrm((n_cls,)),
    )


if __name__ == "__main__":
    N, n_cls, in_dim = 2, 4, 16
    key = jax.random.PRNGKey(0)
    kp, kx = jax.random.split(key)
    params = init_params(kp, n_cls, in_dim)
    x = jax.random.normal(kx, (N, 1, in_dim), jnp.float32)   # PyTorch NCL input

    out = jax.block_until_ready(simplecnn_forward(x, params))

    ref = reference_forward(x, params)
    # bf16 MXU operands with f32 accumulation -> slightly looser tolerance.
    np.testing.assert_allclose(np.asarray(out), np.asarray(ref), rtol=3e-2, atol=3e-2)
    print("KERNEL_OK")
</pallas_src>

<mosaic_0001>
module attributes {stable_mosaic.version = 11 : i64} {
  func.func @simplecnn_kernel(%arg0: i32, %arg1: memref<2x20xf32, #tpu.memory_space<vmem>>, %arg2: memref<5x16xf32, #tpu.memory_space<vmem>>, %arg3: memref<1x16xf32, #tpu.memory_space<vmem>>, %arg4: memref<80x32xbf16, #tpu.memory_space<vmem>>, %arg5: memref<1x32xf32, #tpu.memory_space<vmem>>, %arg6: memref<128x128xbf16, #tpu.memory_space<vmem>>, %arg7: memref<1x128xf32, #tpu.memory_space<vmem>>, %arg8: memref<128x128xbf16, #tpu.memory_space<vmem>>, %arg9: memref<1x128xf32, #tpu.memory_space<vmem>>, %arg10: memref<2x128xf32, #tpu.memory_space<vmem>>) attributes {dimension_semantics = [#tpu.dimension_semantics<parallel>], iteration_bounds = array<i64: 1>, scalar_prefetch = 0 : i64, scratch_operands = 0 : i64, tpu.core_type = #tpu.core_type<tc>, window_params = [{transform_indices = @transform_0, window_bounds = array<i64: 2, 20>}, {pipeline_mode = #tpu.pipeline_mode<synchronous>, transform_indices = @transform_1, window_bounds = array<i64: 5, 16>}, {pipeline_mode = #tpu.pipeline_mode<synchronous>, transform_indices = @transform_2, window_bounds = array<i64: 1, 16>}, {pipeline_mode = #tpu.pipeline_mode<synchronous>, transform_indices = @transform_3, window_bounds = array<i64: 80, 32>}, {pipeline_mode = #tpu.pipeline_mode<synchronous>, transform_indices = @transform_4, window_bounds = array<i64: 1, 32>}, {pipeline_mode = #tpu.pipeline_mode<synchronous>, transform_indices = @transform_5, window_bounds = array<i64: 128, 128>}, {pipeline_mode = #tpu.pipeline_mode<synchronous>, transform_indices = @transform_6, window_bounds = array<i64: 1, 128>}, {pipeline_mode = #tpu.pipeline_mode<synchronous>, transform_indices = @transform_7, window_bounds = array<i64: 128, 128>}, {pipeline_mode = #tpu.pipeline_mode<synchronous>, transform_indices = @transform_8, window_bounds = array<i64: 1, 128>}, {transform_indices = @transform_9, window_bounds = array<i64: 2, 128>}]} {
    %c0 = arith.constant 0 : index
    %c0_0 = arith.constant 0 : index
    %0 = vector.load %arg1[%c0, %c0_0] : memref<2x20xf32, #tpu.memory_space<vmem>>, vector<2x20xf32>
    %1 = vector.shape_cast %0 : vector<2x20xf32> to vector<2x20x1xf32>
    %2 = vector.shape_cast %1 : vector<2x20x1xf32> to vector<2x20x1xf32>
    %3 = vector.broadcast %2 : vector<2x20x1xf32> to vector<2x20x16xf32>
    %c0_1 = arith.constant 0 : index
    %c0_2 = arith.constant 0 : index
    %4 = vector.load %arg2[%c0_1, %c0_2] : memref<5x16xf32, #tpu.memory_space<vmem>>, vector<5x16xf32>
    %5 = vector.extract_strided_slice %4 {offsets = [0, 0], sizes = [1, 16], strides = [1, 1]} : vector<5x16xf32> to vector<1x16xf32>
    %6 = vector.shape_cast %5 : vector<1x16xf32> to vector<16xf32>
    %7 = vector.shape_cast %6 : vector<16xf32> to vector<1x1x16xf32>
    %8 = vector.extract_strided_slice %4 {offsets = [1, 0], sizes = [1, 16], strides = [1, 1]} : vector<5x16xf32> to vector<1x16xf32>
    %9 = vector.shape_cast %8 : vector<1x16xf32> to vector<16xf32>
    %10 = vector.shape_cast %9 : vector<16xf32> to vector<1x1x16xf32>
    %11 = vector.extract_strided_slice %4 {offsets = [2, 0], sizes = [1, 16], strides = [1, 1]} : vector<5x16xf32> to vector<1x16xf32>
    %12 = vector.shape_cast %11 : vector<1x16xf32> to vector<16xf32>
    %13 = vector.shape_cast %12 : vector<16xf32> to vector<1x1x16xf32>
    %14 = vector.extract_strided_slice %4 {offsets = [3, 0], sizes = [1, 16], strides = [1, 1]} : vector<5x16xf32> to vector<1x16xf32>
    %15 = vector.shape_cast %14 : vector<1x16xf32> to vector<16xf32>
    %16 = vector.shape_cast %15 : vector<16xf32> to vector<1x1x16xf32>
    %17 = vector.extract_strided_slice %4 {offsets = [4, 0], sizes = [1, 16], strides = [1, 1]} : vector<5x16xf32> to vector<1x16xf32>
    %18 = vector.shape_cast %17 : vector<1x16xf32> to vector<16xf32>
    %19 = vector.shape_cast %18 : vector<16xf32> to vector<1x1x16xf32>
    %20 = vector.extract_strided_slice %3 {offsets = [0, 0, 0], sizes = [2, 16, 16], strides = [1, 1, 1]} : vector<2x20x16xf32> to vector<2x16x16xf32>
    %21 = vector.broadcast %7 : vector<1x1x16xf32> to vector<2x16x16xf32>
    %22 = arith.mulf %20, %21 : vector<2x16x16xf32>
    %23 = vector.extract_strided_slice %3 {offsets = [0, 1, 0], sizes = [2, 16, 16], strides = [1, 1, 1]} : vector<2x20x16xf32> to vector<2x16x16xf32>
    %24 = vector.broadcast %10 : vector<1x1x16xf32> to vector<2x16x16xf32>
    %25 = arith.mulf %23, %24 : vector<2x16x16xf32>
    %26 = arith.addf %22, %25 : vector<2x16x16xf32>
    %27 = vector.extract_strided_slice %3 {offsets = [0, 2, 0], sizes = [2, 16, 16], strides = [1, 1, 1]} : vector<2x20x16xf32> to vector<2x16x16xf32>
    %28 = vector.broadcast %13 : vector<1x1x16xf32> to vector<2x16x16xf32>
    %29 = arith.mulf %27, %28 : vector<2x16x16xf32>
    %30 = arith.addf %26, %29 : vector<2x16x16xf32>
    %31 = vector.extract_strided_slice %3 {offsets = [0, 3, 0], sizes = [2, 16, 16], strides = [1, 1, 1]} : vector<2x20x16xf32> to vector<2x16x16xf32>
    %32 = vector.broadcast %16 : vector<1x1x16xf32> to vector<2x16x16xf32>
    %33 = arith.mulf %31, %32 : vector<2x16x16xf32>
    %34 = arith.addf %30, %33 : vector<2x16x16xf32>
    %35 = vector.extract_strided_slice %3 {offsets = [0, 4, 0], sizes = [2, 16, 16], strides = [1, 1, 1]} : vector<2x20x16xf32> to vector<2x16x16xf32>
    %36 = vector.broadcast %19 : vector<1x1x16xf32> to vector<2x16x16xf32>
    %37 = arith.mulf %35, %36 : vector<2x16x16xf32>
    %38 = arith.addf %34, %37 : vector<2x16x16xf32>
    %c0_3 = arith.constant 0 : index
    %c0_4 = arith.constant 0 : index
    %39 = vector.load %arg3[%c0_3, %c0_4] : memref<1x16xf32, #tpu.memory_space<vmem>>, vector<1x16xf32>
    %40 = vector.shape_cast %39 : vector<1x16xf32> to vector<1x1x16xf32>
    %41 = vector.broadcast %40 : vector<1x1x16xf32> to vector<2x16x16xf32>
    %42 = arith.addf %38, %41 : vector<2x16x16xf32>
    %cst = arith.constant 0.000000e+00 : f32
    %43 = vector.broadcast %cst : f32 to vector<2x16x16xf32>
    %44 = arith.maximumf %42, %43 : vector<2x16x16xf32>
    %45 = vector.shape_cast %44 : vector<2x16x16xf32> to vector<2x8x2x16xf32>
    %cst_5 = arith.constant dense<0xFF800000> : vector<2x8x16xf32>
    %46 = vector.multi_reduction <maximumf>, %45, %cst_5 [2] : vector<2x8x2x16xf32> to vector<2x8x16xf32>
    %cst_6 = arith.constant 0.000000e+00 : f32
    %47 = vector.broadcast %cst_6 : f32 to vector<2x2x16xf32>
    %48 = tpu.concatenate %47, %46, %47 in 1 : vector<2x2x16xf32>, vector<2x8x16xf32>, vector<2x2x16xf32> -> vector<2x12x16xf32>
    %49 = vector.extract_strided_slice %48 {offsets = [0, 0, 0], sizes = [2, 8, 16], strides = [1, 1, 1]} : vector<2x12x16xf32> to vector<2x8x16xf32>
    %50 = vector.extract_strided_slice %48 {offsets = [0, 1, 0], sizes = [2, 8, 16], strides = [1, 1, 1]} : vector<2x12x16xf32> to vector<2x8x16xf32>
    %51 = vector.extract_strided_slice %48 {offsets = [0, 2, 0], sizes = [2, 8, 16], strides = [1, 1, 1]} : vector<2x12x16xf32> to vector<2x8x16xf32>
    %52 = vector.extract_strided_slice %48 {offsets = [0, 3, 0], sizes = [2, 8, 16], strides = [1, 1, 1]} : vector<2x12x16xf32> to vector<2x8x16xf32>
    %53 = vector.extract_strided_slice %48 {offsets = [0, 4, 0], sizes = [2, 8, 16], strides = [1, 1, 1]} : vector<2x12x16xf32> to vector<2x8x16xf32>
    %54 = tpu.concatenate %49, %50, %51, %52, %53 in 2 : vector<2x8x16xf32>, vector<2x8x16xf32>, vector<2x8x16xf32>, vector<2x8x16xf32>, vector<2x8x16xf32> -> vector<2x8x80xf32>
    %55 = vector.shape_cast %54 : vector<2x8x80xf32> to vector<16x80xf32>
    %56 = arith.truncf %55 : vector<16x80xf32> to vector<16x80xbf16>
    %c0_7 = arith.constant 0 : index
    %c0_8 = arith.constant 0 : index
    %57 = vector.load %arg4[%c0_7, %c0_8] : memref<80x32xbf16, #tpu.memory_space<vmem>>, vector<80x32xbf16>
    %cst_9 = arith.constant dense<0.000000e+00> : vector<16x32xf32>
    %58 = tpu.matmul %56, %57, %cst_9 {dimension_numbers = #tpu.dot_dimension_numbers<[1], [0], [0], [1], [0, 0, 1, 1], [], []>} : vector<16x80xbf16>, vector<80x32xbf16>, vector<16x32xf32> -> vector<16x32xf32>
    %c0_10 = arith.constant 0 : index
    %c0_11 = arith.constant 0 : index
    %59 = vector.load %arg5[%c0_10, %c0_11] : memref<1x32xf32, #tpu.memory_space<vmem>>, vector<1x32xf32>
    %60 = vector.broadcast %59 : vector<1x32xf32> to vector<16x32xf32>
    %61 = arith.addf %58, %60 : vector<16x32xf32>
    %cst_12 = arith.constant 0.000000e+00 : f32
    %62 = vector.broadcast %cst_12 : f32 to vector<16x32xf32>
    %63 = arith.maximumf %61, %62 : vector<16x32xf32>
    %64 = vector.shape_cast %63 : vector<16x32xf32> to vector<2x4x2x32xf32>
    %cst_13 = arith.constant dense<0xFF800000> : vector<2x4x32xf32>
    %65 = vector.multi_reduction <maximumf>, %64, %cst_13 [2] : vector<2x4x2x32xf32> to vector<2x4x32xf32>
    %66 = vector.shape_cast %65 : vector<2x4x32xf32> to vector<2x128xf32>
    %67 = arith.truncf %66 : vector<2x128xf32> to vector<2x128xbf16>
    %c0_14 = arith.constant 0 : index
    %c0_15 = arith.constant 0 : index
    %68 = vector.load %arg6[%c0_14, %c0_15] : memref<128x128xbf16, #tpu.memory_space<vmem>>, vector<128x128xbf16>
    %cst_16 = arith.constant dense<0.000000e+00> : vector<2x128xf32>
    %69 = tpu.matmul %67, %68, %cst_16 {dimension_numbers = #tpu.dot_dimension_numbers<[1], [0], [0], [1], [0, 0, 1, 1], [], []>} : vector<2x128xbf16>, vector<128x128xbf16>, vector<2x128xf32> -> vector<2x128xf32>
    %c0_17 = arith.constant 0 : index
    %c0_18 = arith.constant 0 : index
    %70 = vector.load %arg7[%c0_17, %c0_18] : memref<1x128xf32, #tpu.memory_space<vmem>>, vector<1x128xf32>
    %71 = vector.broadcast %70 : vector<1x128xf32> to vector<2x128xf32>
    %72 = arith.addf %69, %71 : vector<2x128xf32>
    %cst_19 = arith.constant 0.000000e+00 : f32
    %73 = vector.broadcast %cst_19 : f32 to vector<2x128xf32>
    %74 = arith.maximumf %72, %73 : vector<2x128xf32>
    %75 = arith.truncf %74 : vector<2x128xf32> to vector<2x128xbf16>
    %c0_20 = arith.constant 0 : index
    %c0_21 = arith.constant 0 : index
    %76 = vector.load %arg8[%c0_20, %c0_21] : memref<128x128xbf16, #tpu.memory_space<vmem>>, vector<128x128xbf16>
    %cst_22 = arith.constant dense<0.000000e+00> : vector<2x128xf32>
    %77 = tpu.matmul %75, %76, %cst_22 {dimension_numbers = #tpu.dot_dimension_numbers<[1], [0], [0], [1], [0, 0, 1, 1], [], []>} : vector<2x128xbf16>, vector<128x128xbf16>, vector<2x128xf32> -> vector<2x128xf32>
    %c0_23 = arith.constant 0 : index
    %c0_24 = arith.constant 0 : index
    %78 = vector.load %arg9[%c0_23, %c0_24] : memref<1x128xf32, #tpu.memory_space<vmem>>, vector<1x128xf32>
    %79 = vector.broadcast %78 : vector<1x128xf32> to vector<2x128xf32>
    %80 = arith.addf %77, %79 : vector<2x128xf32>
    %c0_25 = arith.constant 0 : index
    %c0_26 = arith.constant 0 : index
    %81 = vector.load %arg10[%c0_25, %c0_26] : memref<2x128xf32, #tpu.memory_space<vmem>>, vector<2x128xf32>
    tpu.vector_store %arg10[%c0_25, %c0_26], %80 {strides = array<i32>} : memref<2x128xf32, #tpu.memory_space<vmem>>, vector<2x128xf32>,
    return
  }
  func.func @transform_0(%arg0: i32) -> (i32, i32) {
    %c0_i32 = arith.constant 0 : i32
    %c0_i32_0 = arith.constant 0 : i32
    return %arg0, %c0_i32 : i32, i32
  }
  func.func @transform_1(%arg0: i32) -> (i32, i32) {
    %c0_i32 = arith.constant 0 : i32
    %c0_i32_0 = arith.constant 0 : i32
    %c0_i32_1 = arith.constant 0 : i32
    return %c0_i32, %c0_i32_0 : i32, i32
  }
  func.func @transform_2(%arg0: i32) -> (i32, i32) {
    %c0_i32 = arith.constant 0 : i32
    %c0_i32_0 = arith.constant 0 : i32
    %c0_i32_1 = arith.constant 0 : i32
    return %c0_i32, %c0_i32_0 : i32, i32
  }
  func.func @transform_3(%arg0: i32) -> (i32, i32) {
    %c0_i32 = arith.constant 0 : i32
    %c0_i32_0 = arith.constant 0 : i32
    %c0_i32_1 = arith.constant 0 : i32
    return %c0_i32, %c0_i32_0 : i32, i32
  }
  func.func @transform_4(%arg0: i32) -> (i32, i32) {
    %c0_i32 = arith.constant 0 : i32
    %c0_i32_0 = arith.constant 0 : i32
    %c0_i32_1 = arith.constant 0 : i32
    return %c0_i32, %c0_i32_0 : i32, i32
  }
  func.func @transform_5(%arg0: i32) -> (i32, i32) {
    %c0_i32 = arith.constant 0 : i32
    %c0_i32_0 = arith.constant 0 : i32
    %c0_i32_1 = arith.constant 0 : i32
    return %c0_i32, %c0_i32_0 : i32, i32
  }
  func.func @transform_6(%arg0: i32) -> (i32, i32) {
    %c0_i32 = arith.constant 0 : i32
    %c0_i32_0 = arith.constant 0 : i32
    %c0_i32_1 = arith.constant 0 : i32
    return %c0_i32, %c0_i32_0 : i32, i32
  }
  func.func @transform_7(%arg0: i32) -> (i32, i32) {
    %c0_i32 = arith.constant 0 : i32
    %c0_i32_0 = arith.constant 0 : i32
    %c0_i32_1 = arith.constant 0 : i32
    return %c0_i32, %c0_i32_0 : i32, i32
  }
  func.func @transform_8(%arg0: i32) -> (i32, i32) {
    %c0_i32 = arith.constant 0 : i32
    %c0_i32_0 = arith.constant 0 : i32
    %c0_i32_1 = arith.constant 0 : i32
    return %c0_i32, %c0_i32_0 : i32, i32
  }
  func.func @transform_9(%arg0: i32) -> (i32, i32) {
    %c0_i32 = arith.constant 0 : i32
    %c0_i32_0 = arith.constant 0 : i32
    return %arg0, %c0_i32 : i32, i32
  }
}

module attributes {stable_mosaic.version = 11 : i64} {
  func.func @simplecnn_kernel(%arg0: i32, %arg1: memref<2x20xf32, #tpu.memory_space<vmem>>, %arg2: memref<5x16xf32, #tpu.memory_space<vmem>>, %arg3: memref<1x16xf32, #tpu.memory_space<vmem>>, %arg4: memref<80x32xbf16, #tpu.memory_space<vmem>>, %arg5: memref<1x32xf32, #tpu.memory_space<vmem>>, %arg6: memref<128x128xbf16, #tpu.memory_space<vmem>>, %arg7: memref<1x128xf32, #tpu.memory_space<vmem>>, %arg8: memref<128x128xbf16, #tpu.memory_space<vmem>>, %arg9: memref<1x128xf32, #tpu.memory_space<vmem>>, %arg10: memref<2x128xf32, #tpu.memory_space<vmem>>) attributes {dimension_semantics = [#tpu.dimension_semantics<parallel>], iteration_bounds = array<i64: 1>, scalar_prefetch = 0 : i64, scratch_operands = 0 : i64, tpu.core_type = #tpu.core_type<tc>, window_params = [{transform_indices = @transform_0, window_bounds = array<i64: 2, 20>}, {pipeline_mode = #tpu.pipeline_mode<synchronous>, transform_indices = @transform_1, window_bounds = array<i64: 5, 16>}, {pipeline_mode = #tpu.pipeline_mode<synchronous>, transform_indices = @transform_2, window_bounds = array<i64: 1, 16>}, {pipeline_mode = #tpu.pipeline_mode<synchronous>, transform_indices = @transform_3, window_bounds = array<i64: 80, 32>}, {pipeline_mode = #tpu.pipeline_mode<synchronous>, transform_indices = @transform_4, window_bounds = array<i64: 1, 32>}, {pipeline_mode = #tpu.pipeline_mode<synchronous>, transform_indices = @transform_5, window_bounds = array<i64: 128, 128>}, {pipeline_mode = #tpu.pipeline_mode<synchronous>, transform_indices = @transform_6, window_bounds = array<i64: 1, 128>}, {pipeline_mode = #tpu.pipeline_mode<synchronous>, transform_indices = @transform_7, window_bounds = array<i64: 128, 128>}, {pipeline_mode = #tpu.pipeline_mode<synchronous>, transform_indices = @transform_8, window_bounds = array<i64: 1, 128>}, {transform_indices = @transform_9, window_bounds = array<i64: 2, 128>}]} {
    %c0 = arith.constant 0 : index
    %c0_0 = arith.constant 0 : index
    %0 = vector.load %arg1[%c0, %c0_0] : memref<2x20xf32, #tpu.memory_space<vmem>>, vector<2x20xf32>
    %1 = vector.shape_cast %0 : vector<2x20xf32> to vector<2x20x1xf32>
    %2 = vector.shape_cast %1 : vector<2x20x1xf32> to vector<2x20x1xf32>
    %3 = vector.broadcast %2 : vector<2x20x1xf32> to vector<2x20x16xf32>
    %c0_1 = arith.constant 0 : index
    %c0_2 = arith.constant 0 : index
    %4 = vector.load %arg2[%c0_1, %c0_2] : memref<5x16xf32, #tpu.memory_space<vmem>>, vector<5x16xf32>
    %5 = vector.extract_strided_slice %4 {offsets = [0, 0], sizes = [1, 16], strides = [1, 1]} : vector<5x16xf32> to vector<1x16xf32>
    %6 = vector.shape_cast %5 : vector<1x16xf32> to vector<16xf32>
    %7 = vector.shape_cast %6 : vector<16xf32> to vector<1x1x16xf32>
    %8 = vector.extract_strided_slice %4 {offsets = [1, 0], sizes = [1, 16], strides = [1, 1]} : vector<5x16xf32> to vector<1x16xf32>
    %9 = vector.shape_cast %8 : vector<1x16xf32> to vector<16xf32>
    %10 = vector.shape_cast %9 : vector<16xf32> to vector<1x1x16xf32>
    %11 = vector.extract_strided_slice %4 {offsets = [2, 0], sizes = [1, 16], strides = [1, 1]} : vector<5x16xf32> to vector<1x16xf32>
    %12 = vector.shape_cast %11 : vector<1x16xf32> to vector<16xf32>
    %13 = vector.shape_cast %12 : vector<16xf32> to vector<1x1x16xf32>
    %14 = vector.extract_strided_slice %4 {offsets = [3, 0], sizes = [1, 16], strides = [1, 1]} : vector<5x16xf32> to vector<1x16xf32>
    %15 = vector.shape_cast %14 : vector<1x16xf32> to vector<16xf32>
    %16 = vector.shape_cast %15 : vector<16xf32> to vector<1x1x16xf32>
    %17 = vector.extract_strided_slice %4 {offsets = [4, 0], sizes = [1, 16], strides = [1, 1]} : vector<5x16xf32> to vector<1x16xf32>
    %18 = vector.shape_cast %17 : vector<1x16xf32> to vector<16xf32>
    %19 = vector.shape_cast %18 : vector<16xf32> to vector<1x1x16xf32>
    %20 = vector.extract_strided_slice %3 {offsets = [0, 0, 0], sizes = [2, 16, 16], strides = [1, 1, 1]} : vector<2x20x16xf32> to vector<2x16x16xf32>
    %21 = vector.broadcast %7 : vector<1x1x16xf32> to vector<2x16x16xf32>
    %22 = arith.mulf %20, %21 : vector<2x16x16xf32>
    %23 = vector.extract_strided_slice %3 {offsets = [0, 1, 0], sizes = [2, 16, 16], strides = [1, 1, 1]} : vector<2x20x16xf32> to vector<2x16x16xf32>
    %24 = vector.broadcast %10 : vector<1x1x16xf32> to vector<2x16x16xf32>
    %25 = arith.mulf %23, %24 : vector<2x16x16xf32>
    %26 = arith.addf %22, %25 : vector<2x16x16xf32>
    %27 = vector.extract_strided_slice %3 {offsets = [0, 2, 0], sizes = [2, 16, 16], strides = [1, 1, 1]} : vector<2x20x16xf32> to vector<2x16x16xf32>
    %28 = vector.broadcast %13 : vector<1x1x16xf32> to vector<2x16x16xf32>
    %29 = arith.mulf %27, %28 : vector<2x16x16xf32>
    %30 = arith.addf %26, %29 : vector<2x16x16xf32>
    %31 = vector.extract_strided_slice %3 {offsets = [0, 3, 0], sizes = [2, 16, 16], strides = [1, 1, 1]} : vector<2x20x16xf32> to vector<2x16x16xf32>
    %32 = vector.broadcast %16 : vector<1x1x16xf32> to vector<2x16x16xf32>
    %33 = arith.mulf %31, %32 : vector<2x16x16xf32>
    %34 = arith.addf %30, %33 : vector<2x16x16xf32>
    %35 = vector.extract_strided_slice %3 {offsets = [0, 4, 0], sizes = [2, 16, 16], strides = [1, 1, 1]} : vector<2x20x16xf32> to vector<2x16x16xf32>
    %36 = vector.broadcast %19 : vector<1x1x16xf32> to vector<2x16x16xf32>
    %37 = arith.mulf %35, %36 : vector<2x16x16xf32>
    %38 = arith.addf %34, %37 : vector<2x16x16xf32>
    %c0_3 = arith.constant 0 : index
    %c0_4 = arith.constant 0 : index
    %39 = vector.load %arg3[%c0_3, %c0_4] : memref<1x16xf32, #tpu.memory_space<vmem>>, vector<1x16xf32>
    %40 = vector.shape_cast %39 : vector<1x16xf32> to vector<1x1x16xf32>
    %41 = vector.broadcast %40 : vector<1x1x16xf32> to vector<2x16x16xf32>
    %42 = arith.addf %38, %41 : vector<2x16x16xf32>
    %cst = arith.constant 0.000000e+00 : f32
    %43 = vector.broadcast %cst : f32 to vector<2x16x16xf32>
    %44 = arith.maximumf %42, %43 : vector<2x16x16xf32>
    %45 = vector.shape_cast %44 : vector<2x16x16xf32> to vector<2x8x2x16xf32>
    %cst_5 = arith.constant dense<0xFF800000> : vector<2x8x16xf32>
    %46 = vector.multi_reduction <maximumf>, %45, %cst_5 [2] : vector<2x8x2x16xf32> to vector<2x8x16xf32>
    %cst_6 = arith.constant 0.000000e+00 : f32
    %47 = vector.broadcast %cst_6 : f32 to vector<2x2x16xf32>
    %48 = tpu.concatenate %47, %46, %47 in 1 : vector<2x2x16xf32>, vector<2x8x16xf32>, vector<2x2x16xf32> -> vector<2x12x16xf32>
    %49 = vector.extract_strided_slice %48 {offsets = [0, 0, 0], sizes = [2, 8, 16], strides = [1, 1, 1]} : vector<2x12x16xf32> to vector<2x8x16xf32>
    %50 = vector.extract_strided_slice %48 {offsets = [0, 1, 0], sizes = [2, 8, 16], strides = [1, 1, 1]} : vector<2x12x16xf32> to vector<2x8x16xf32>
    %51 = vector.extract_strided_slice %48 {offsets = [0, 2, 0], sizes = [2, 8, 16], strides = [1, 1, 1]} : vector<2x12x16xf32> to vector<2x8x16xf32>
    %52 = vector.extract_strided_slice %48 {offsets = [0, 3, 0], sizes = [2, 8, 16], strides = [1, 1, 1]} : vector<2x12x16xf32> to vector<2x8x16xf32>
    %53 = vector.extract_strided_slice %48 {offsets = [0, 4, 0], sizes = [2, 8, 16], strides = [1, 1, 1]} : vector<2x12x16xf32> to vector<2x8x16xf32>
    %54 = tpu.concatenate %49, %50, %51, %52, %53 in 2 : vector<2x8x16xf32>, vector<2x8x16xf32>, vector<2x8x16xf32>, vector<2x8x16xf32>, vector<2x8x16xf32> -> vector<2x8x80xf32>
    %55 = vector.shape_cast %54 : vector<2x8x80xf32> to vector<16x80xf32>
    %56 = arith.truncf %55 : vector<16x80xf32> to vector<16x80xbf16>
    %c0_7 = arith.constant 0 : index
    %c0_8 = arith.constant 0 : index
    %57 = vector.load %arg4[%c0_7, %c0_8] : memref<80x32xbf16, #tpu.memory_space<vmem>>, vector<80x32xbf16>
    %cst_9 = arith.constant dense<0.000000e+00> : vector<16x32xf32>
    %58 = tpu.matmul %56, %57, %cst_9 {dimension_numbers = #tpu.dot_dimension_numbers<[1], [0], [0], [1], [0, 0, 1, 1], [], []>} : vector<16x80xbf16>, vector<80x32xbf16>, vector<16x32xf32> -> vector<16x32xf32>
    %c0_10 = arith.constant 0 : index
    %c0_11 = arith.constant 0 : index
    %59 = vector.load %arg5[%c0_10, %c0_11] : memref<1x32xf32, #tpu.memory_space<vmem>>, vector<1x32xf32>
    %60 = vector.broadcast %59 : vector<1x32xf32> to vector<16x32xf32>
    %61 = arith.addf %58, %60 : vector<16x32xf32>
    %cst_12 = arith.constant 0.000000e+00 : f32
    %62 = vector.broadcast %cst_12 : f32 to vector<16x32xf32>
    %63 = arith.maximumf %61, %62 : vector<16x32xf32>
    %64 = vector.shape_cast %63 : vector<16x32xf32> to vector<2x4x2x32xf32>
    %cst_13 = arith.constant dense<0xFF800000> : vector<2x4x32xf32>
    %65 = vector.multi_reduction <maximumf>, %64, %cst_13 [2] : vector<2x4x2x32xf32> to vector<2x4x32xf32>
    %66 = vector.shape_cast %65 : vector<2x4x32xf32> to vector<2x128xf32>
    %67 = arith.truncf %66 : vector<2x128xf32> to vector<2x128xbf16>
    %c0_14 = arith.constant 0 : index
    %c0_15 = arith.constant 0 : index
    %68 = vector.load %arg6[%c0_14, %c0_15] : memref<128x128xbf16, #tpu.memory_space<vmem>>, vector<128x128xbf16>
    %cst_16 = arith.constant dense<0.000000e+00> : vector<2x128xf32>
    %69 = tpu.matmul %67, %68, %cst_16 {dimension_numbers = #tpu.dot_dimension_numbers<[1], [0], [0], [1], [0, 0, 1, 1], [], []>} : vector<2x128xbf16>, vector<128x128xbf16>, vector<2x128xf32> -> vector<2x128xf32>
    %c0_17 = arith.constant 0 : index
    %c0_18 = arith.constant 0 : index
    %70 = vector.load %arg7[%c0_17, %c0_18] : memref<1x128xf32, #tpu.memory_space<vmem>>, vector<1x128xf32>
    %71 = vector.broadcast %70 : vector<1x128xf32> to vector<2x128xf32>
    %72 = arith.addf %69, %71 : vector<2x128xf32>
    %cst_19 = arith.constant 0.000000e+00 : f32
    %73 = vector.broadcast %cst_19 : f32 to vector<2x128xf32>
    %74 = arith.maximumf %72, %73 : vector<2x128xf32>
    %75 = arith.truncf %74 : vector<2x128xf32> to vector<2x128xbf16>
    %c0_20 = arith.constant 0 : index
    %c0_21 = arith.constant 0 : index
    %76 = vector.load %arg8[%c0_20, %c0_21] : memref<128x128xbf16, #tpu.memory_space<vmem>>, vector<128x128xbf16>
    %cst_22 = arith.constant dense<0.000000e+00> : vector<2x128xf32>
    %77 = tpu.matmul %75, %76, %cst_22 {dimension_numbers = #tpu.dot_dimension_numbers<[1], [0], [0], [1], [0, 0, 1, 1], [], []>} : vector<2x128xbf16>, vector<128x128xbf16>, vector<2x128xf32> -> vector<2x128xf32>
    %c0_23 = arith.constant 0 : index
    %c0_24 = arith.constant 0 : index
    %78 = vector.load %arg9[%c0_23, %c0_24] : memref<1x128xf32, #tpu.memory_space<vmem>>, vector<1x128xf32>
    %79 = vector.broadcast %78 : vector<1x128xf32> to vector<2x128xf32>
    %80 = arith.addf %77, %79 : vector<2x128xf32>
    %c0_25 = arith.constant 0 : index
    %c0_26 = arith.constant 0 : index
    %81 = vector.load %arg10[%c0_25, %c0_26] : memref<2x128xf32, #tpu.memory_space<vmem>>, vector<2x128xf32>
    tpu.vector_store %arg10[%c0_25, %c0_26], %80 {strides = array<i32>} : memref<2x128xf32, #tpu.memory_space<vmem>>, vector<2x128xf32>,
    return
  }
  func.func @transform_0(%arg0: i32) -> (i32, i32) {
    %c0_i32 = arith.constant 0 : i32
    %c0_i32_0 = arith.constant 0 : i32
    return %arg0, %c0_i32 : i32, i32
  }
  func.func @transform_1(%arg0: i32) -> (i32, i32) {
    %c0_i32 = arith.constant 0 : i32
    %c0_i32_0 = arith.constant 0 : i32
    %c0_i32_1 = arith.constant 0 : i32
    return %c0_i32, %c0_i32_0 : i32, i32
  }
  func.func @transform_2(%arg0: i32) -> (i32, i32) {
    %c0_i32 = arith.constant 0 : i32
    %c0_i32_0 = arith.constant 0 : i32
    %c0_i32_1 = arith.constant 0 : i32
    return %c0_i32, %c0_i32_0 : i32, i32
  }
  func.func @transform_3(%arg0: i32) -> (i32, i32) {
    %c0_i32 = arith.constant 0 : i32
    %c0_i32_0 = arith.constant 0 : i32
    %c0_i32_1 = arith.constant 0 : i32
    return %c0_i32, %c0_i32_0 : i32, i32
  }
  func.func @transform_4(%arg0: i32) -> (i32, i32) {
    %c0_i32 = arith.constant 0 : i32
    %c0_i32_0 = arith.constant 0 : i32
    %c0_i32_1 = arith.constant 0 : i32
    return %c0_i32, %c0_i32_0 : i32, i32
  }
  func.func @transform_5(%arg0: i32) -> (i32, i32) {
    %c0_i32 = arith.constant 0 : i32
    %c0_i32_0 = arith.constant 0 : i32
    %c0_i32_1 = arith.constant 0 : i32
    return %c0_i32, %c0_i32_0 : i32, i32
  }
  func.func @transform_6(%arg0: i32) -> (i32, i32) {
    %c0_i32 = arith.constant 0 : i32
    %c0_i32_0 = arith.constant 0 : i32
    %c0_i32_1 = arith.constant 0 : i32
    return %c0_i32, %c0_i32_0 : i32, i32
  }
  func.func @transform_7(%arg0: i32) -> (i32, i32) {
    %c0_i32 = arith.constant 0 : i32
    %c0_i32_0 = arith.constant 0 : i32
    %c0_i32_1 = arith.constant 0 : i32
    return %c0_i32, %c0_i32_0 : i32, i32
  }
  func.func @transform_8(%arg0: i32) -> (i32, i32) {
    %c0_i32 = arith.constant 0 : i32
    %c0_i32_0 = arith.constant 0 : i32
    %c0_i32_1 = arith.constant 0 : i32
    return %c0_i32, %c0_i32_0 : i32, i32
  }
  func.func @transform_9(%arg0: i32) -> (i32, i32) {
    %c0_i32 = arith.constant 0 : i32
    %c0_i32_0 = arith.constant 0 : i32
    return %arg0, %c0_i32 : i32, i32
  }
}

</mosaic_0001>

<llo_original>
// kernel: tpu_custom_call.1
$region0: #{tpu_custom_call.1}
  #allocation0 [shape = 'u32[]', space=smem, size = 0x4, offset = 0x4, fixed_abs, tag = 'smem constant byte address 0x4 - core index']
  #allocation1 [shape = 'u32[144,128]{1,0:T(1,128)}', space=vmem, size = 0x12000, scoped, tag = 'internal scratch']
  %s0 = inlined_call_operand.vmem [shape: f32[2,20], index: 0, kind: input, shape index: {}]
  %s1 = inlined_call_operand.vmem [shape: f32[5,16], index: 1, kind: input, shape index: {}]
  %s2 = inlined_call_operand.hbm [shape: f32[1,16], index: 2, kind: input, shape index: {}]
  %s3 = inlined_call_operand.vmem [shape: bf16[80,32], index: 3, kind: input, shape index: {}]
  %s4 = inlined_call_operand.hbm [shape: f32[1,32], index: 4, kind: input, shape index: {}]
  %s5 = inlined_call_operand.vmem [shape: bf16[128,128], index: 5, kind: input, shape index: {}]
  %s6 = inlined_call_operand.vmem [shape: f32[1,128], index: 6, kind: input, shape index: {}]
  %s7 = inlined_call_operand.hbm [shape: bf16[128,128], index: 7, kind: input, shape index: {}]
  %s8 = inlined_call_operand.vmem [shape: f32[1,128], index: 8, kind: input, shape index: {}]
  %s9 = inlined_call_operand.hbm [shape: f32[2,128], index: 9, kind: output, shape index: {}]
  %s10 = sld [smem:[#allocation0]]
  $region58: #{tpu_custom_call.1} parent=0
    _
  %s12 = ssub.s32 1, %s10
  %s13 = scalar_select 0, %s12, %s10
  $region1: #{tpu_custom_call.1} parent=0
    #allocation2 [shape = 'u8[512]{0}', space=vmem, size = 0x400, scoped, tag = 'input window, operand 2, single buffered']
    #allocation3 [shape = 's32[1]{0}', space=sflag, size = 0x4, scoped, tag = 'scoped memory for tpu_custom_call.1']
    #allocation4 [shape = 's32[1]{0}', space=sflag, size = 0x4, scoped, tag = 'scoped memory for tpu_custom_call.1']
    #allocation5 [shape = 'u8[512]{0}', space=vmem, size = 0x400, scoped, tag = 'input window, operand 4, single buffered']
    #allocation6 [shape = 's32[1]{0}', space=sflag, size = 0x4, scoped, tag = 'scoped memory for tpu_custom_call.1']
    #allocation7 [shape = 'u8[32768]{0}', space=vmem, size = 0x8000, scoped, tag = 'input window, operand 7, single buffered']
    #allocation8 [shape = 'u8[1024]{0}', space=vmem, size = 0x400, scoped, tag = 'output window, operand 0, single buffered']
    %14 = vsyncpa [#allocation3], 0
    %15 = vsyncpa [#allocation6], 0
    %16 = vsyncpa [#allocation4], 0
    // Predicated region
    $region2: #{tpu_custom_call.1} parent=1 // pred_check
      _
    $region3: #{tpu_custom_call.1} parent=1 // pred_check_branch
      %18 = sbr.rel (0) target = $region5
    $region4: #{tpu_custom_call.1} parent=1 // pred_region
      _
    $region5: #{tpu_custom_call.1} parent=1 // pred_fallthru
      _
    // Predicated region
    $region6: #{tpu_custom_call.1} parent=1 // pred_check
      _
    $region7: #{tpu_custom_call.1} parent=1 // pred_check_branch
      %20 = sbr.rel (0) target = $region9
    $region8: #{tpu_custom_call.1} parent=1 // pred_region
      _
    $region9: #{tpu_custom_call.1} parent=1 // pred_fallthru
      _
    // Predicated region
    $region10: #{tpu_custom_call.1} parent=1 // pred_check
      _
    $region11: #{tpu_custom_call.1} parent=1 // pred_check_branch
      %22 = sbr.rel (0) target = $region13
    $region12: #{tpu_custom_call.1} parent=1 // pred_region
      %s24 = ssub.s32 16, 16
      %25 = vsyncadd [#allocation3], %s24
      %s27 = sshll.u32 [#allocation2], 4
      %s28 = int_to_ptr.vmem [resolvable:$true] %s27
      %30 = dma.hbm_to_vmem [thread:$0]  %s2, 16, %s28, [#allocation3]
    $region13: #{tpu_custom_call.1} parent=1 // pred_fallthru
      _
    // Predicated region
    $region14: #{tpu_custom_call.1} parent=1 // pred_check
      _
    $region15: #{tpu_custom_call.1} parent=1 // pred_check_branch
      %32 = sbr.rel (0) target = $region17
    $region16: #{tpu_custom_call.1} parent=1 // pred_region
      _
    $region17: #{tpu_custom_call.1} parent=1 // pred_fallthru
      _
    // Predicated region
    $region18: #{tpu_custom_call.1} parent=1 // pred_check
      _
    $region19: #{tpu_custom_call.1} parent=1 // pred_check_branch
      %34 = sbr.rel (0) target = $region21
    $region20: #{tpu_custom_call.1} parent=1 // pred_region
      %s36 = ssub.s32 16, 16
      %37 = vsyncadd [#allocation6], %s36
      %s39 = sshll.u32 [#allocation5], 4
      %s40 = int_to_ptr.vmem [resolvable:$true] %s39
      %42 = dma.hbm_to_vmem [thread:$0]  %s4, 16, %s40, [#allocation6]
    $region21: #{tpu_custom_call.1} parent=1 // pred_fallthru
      _
    // Predicated region
    $region22: #{tpu_custom_call.1} parent=1 // pred_check
      _
    $region23: #{tpu_custom_call.1} parent=1 // pred_check_branch
      %44 = sbr.rel (0) target = $region25
    $region24: #{tpu_custom_call.1} parent=1 // pred_region
      _
    $region25: #{tpu_custom_call.1} parent=1 // pred_fallthru
      _
    // Predicated region
    $region26: #{tpu_custom_call.1} parent=1 // pred_check
      _
    $region27: #{tpu_custom_call.1} parent=1 // pred_check_branch
      %46 = sbr.rel (0) target = $region29
    $region28: #{tpu_custom_call.1} parent=1 // pred_region
      _
    $region29: #{tpu_custom_call.1} parent=1 // pred_fallthru
      _
    // Predicated region
    $region30: #{tpu_custom_call.1} parent=1 // pred_check
      _
    $region31: #{tpu_custom_call.1} parent=1 // pred_check_branch
      %48 = sbr.rel (0) target = $region33
    $region32: #{tpu_custom_call.1} parent=1 // pred_region
      %s50 = ssub.s32 1024, 1024
      %51 = vsyncadd [#allocation6], %s50
      %s52 = sshll.u32 [#allocation7], 4
      %s53 = int_to_ptr.vmem [resolvable:$true] %s52
      %58 = dma.hbm_to_vmem [thread:$0]  %s7, 1024, %s53, [#allocation6], 64, 64, 4
    $region33: #{tpu_custom_call.1} parent=1 // pred_fallthru
      _
    // Predicated region
    $region34: #{tpu_custom_call.1} parent=1 // pred_check
      _
    $region35: #{tpu_custom_call.1} parent=1 // pred_check_branch
      %60 = sbr.rel (0) target = $region37
    $region36: #{tpu_custom_call.1} parent=1 // pred_region
      _
    $region37: #{tpu_custom_call.1} parent=1 // pred_fallthru
      _
    // Predicated region
    $region38: #{tpu_custom_call.1} parent=1 // pred_check
      _
    $region39: #{tpu_custom_call.1} parent=1 // pred_check_branch
      %62 = sbr.rel (0) target = $region41
    $region40: #{tpu_custom_call.1} parent=1 // pred_region
      %63 = dma.done [#allocation3], 16
    $region41: #{tpu_custom_call.1} parent=1 // pred_fallthru
      _
    // Predicated region
    $region42: #{tpu_custom_call.1} parent=1 // pred_check
      _
    $region43: #{tpu_custom_call.1} parent=1 // pred_check_branch
      %65 = sbr.rel (0) target = $region45
    $region44: #{tpu_custom_call.1} parent=1 // pred_region
      %66 = dma.done [#allocation6], 16
    $region45: #{tpu_custom_call.1} parent=1 // pred_fallthru
      _
    // Predicated region
    $region46: #{tpu_custom_call.1} parent=1 // pred_check
      _
    $region47: #{tpu_custom_call.1} parent=1 // pred_check_branch
      %68 = sbr.rel (0) target = $region49
    $region48: #{tpu_custom_call.1} parent=1 // pred_region
      %69 = dma.done [#allocation6], 1024
    $region49: #{tpu_custom_call.1} parent=1 // pred_fallthru
      _
    %v71 = vld [vmem:[%s0] sm:$0x3]
    %v72 = vlaneseq
    %v73 = vshrl.u32 %v72, 7
    %v74 = vsub.s32 0, %v73
    %v75 = vrot.slane %v71, %v74
    %77 = vbcast.lane.b32.xlu0 %v75, 256
    %v78 = vpop.permute.xlu0 %77
    %s80 = sor.u32 256, 8
    %81 = vbcast.lane.b32.xlu0 %v75, %s80
    %v82 = vpop.permute.xlu0 %81
    %s84 = sor.u32 256, 16
    %85 = vbcast.lane.b32.xlu0 %v75, %s84
    %v86 = vpop.permute.xlu0 %85
    %v87 = vlaneseq
    %v88 = vshrl.u32 %v87, 7
    %v89 = vsub.s32 1, %v88
    %v90 = vrot.slane %v71, %v89
    %92 = vbcast.lane.b32.xlu0 %v90, 256
    %v93 = vpop.permute.xlu0 %92
    %s95 = sor.u32 256, 8
    %96 = vbcast.lane.b32.xlu0 %v90, %s95
    %v97 = vpop.permute.xlu0 %96
    %s99 = sor.u32 256, 16
    %100 = vbcast.lane.b32.xlu0 %v90, %s99
    %v101 = vpop.permute.xlu0 %100
    %v102 = vld [vmem:[%s1] sm:$0x1f]
    %v103 = vlaneseq
    %v104 = vshrl.u32 %v103, 7
    %v105 = vsub.s32 0, %v104
    %v106 = vrot.slane %v102, %v105
    %v107 = vmul.f32 %v78, %v106
    %v108 = vmul.f32 %v82, %v106
    %v109 = vmul.f32 %v93, %v106
    %v110 = vmul.f32 %v97, %v106
    %v111 = vlaneseq
    %v112 = vshrl.u32 %v111, 7
    %v113 = vsub.s32 1, %v112
    %v114 = vrot.slane %v102, %v113
    %v115 = vmul.f32 %v78, %v114
    %v116 = vmul.f32 %v82, %v114
    %v117 = vmul.f32 %v86, %v114
    %v118 = vmul.f32 %v93, %v114
    %v119 = vmul.f32 %v97, %v114
    %v120 = vmul.f32 %v101, %v114
    %vm127 = vcmask 1046528
    %v128 = vrot.slane %v115, 1
    %v129 = vrot.slane %v116, 1
    %v130 = vsel %vm127, %v128, %v129
    %v131 = vrot.slane %v117, 1
    %v132 = vsel %vm127, %v129, %v131
    %v133 = vrot.slane %v118, 1
    %v134 = vrot.slane %v119, 1
    %v135 = vsel %vm127, %v133, %v134
    %v136 = vrot.slane %v120, 1
    %v137 = vsel %vm127, %v134, %v136
    %v142 = vadd.f32 %v107, %v130
    %v143 = vadd.f32 %v108, %v132
    %v144 = vadd.f32 %v109, %v135
    %v145 = vadd.f32 %v110, %v137
    %v146 = vlaneseq
    %v147 = vshrl.u32 %v146, 7
    %v148 = vsub.s32 2, %v147
    %v149 = vrot.slane %v102, %v148
    %v150 = vmul.f32 %v78, %v149
    %v151 = vmul.f32 %v82, %v149
    %v152 = vmul.f32 %v86, %v149
    %v153 = vmul.f32 %v93, %v149
    %v154 = vmul.f32 %v97, %v149
    %v155 = vmul.f32 %v101, %v149
    %vm162 = vcmask 1045504
    %v163 = vrot.slane %v150, 2
    %v164 = vrot.slane %v151, 2
    %v165 = vsel %vm162, %v163, %v164
    %v166 = vrot.slane %v152, 2
    %v167 = vsel %vm162, %v164, %v166
    %v168 = vrot.slane %v153, 2
    %v169 = vrot.slane %v154, 2
    %v170 = vsel %vm162, %v168, %v169
    %v171 = vrot.slane %v155, 2
    %v172 = vsel %vm162, %v169, %v171
    %v177 = vadd.f32 %v142, %v165
    %v178 = vadd.f32 %v143, %v167
    %v179 = vadd.f32 %v144, %v170
    %v180 = vadd.f32 %v145, %v172
    %v181 = vlaneseq
    %v182 = vshrl.u32 %v181, 7
    %v183 = vsub.s32 3, %v182
    %v184 = vrot.slane %v102, %v183
    %v185 = vmul.f32 %v78, %v184
    %v186 = vmul.f32 %v82, %v184
    %v187 = vmul.f32 %v86, %v184
    %v188 = vmul.f32 %v93, %v184
    %v189 = vmul.f32 %v97, %v184
    %v190 = vmul.f32 %v101, %v184
    %vm197 = vcmask 1044480
    %v198 = vrot.slane %v185, 3
    %v199 = vrot.slane %v186, 3
    %v200 = vsel %vm197, %v198, %v199
    %v201 = vrot.slane %v187, 3
    %v202 = vsel %vm197, %v199, %v201
    %v203 = vrot.slane %v188, 3
    %v204 = vrot.slane %v189, 3
    %v205 = vsel %vm197, %v203, %v204
    %v206 = vrot.slane %v190, 3
    %v207 = vsel %vm197, %v204, %v206
    %v212 = vadd.f32 %v177, %v200
    %v213 = vadd.f32 %v178, %v202
    %v214 = vadd.f32 %v179, %v205
    %v215 = vadd.f32 %v180, %v207
    %v216 = vlaneseq
    %v217 = vshrl.u32 %v216, 7
    %v218 = vsub.s32 4, %v217
    %v219 = vrot.slane %v102, %v218
    %v220 = vmul.f32 %v78, %v219
    %v221 = vmul.f32 %v82, %v219
    %v222 = vmul.f32 %v86, %v219
    %v223 = vmul.f32 %v93, %v219
    %v224 = vmul.f32 %v97, %v219
    %v225 = vmul.f32 %v101, %v219
    %vm232 = vcmask 1043456
    %v233 = vrot.slane %v220, 4
    %v234 = vrot.slane %v221, 4
    %v235 = vsel %vm232, %v233, %v234
    %v236 = vrot.slane %v222, 4
    %v237 = vsel %vm232, %v234, %v236
    %v238 = vrot.slane %v223, 4
    %v239 = vrot.slane %v224, 4
    %v240 = vsel %vm232, %v238, %v239
    %v241 = vrot.slane %v225, 4
    %v242 = vsel %vm232, %v239, %v241
    %v247 = vadd.f32 %v212, %v235
    %v248 = vadd.f32 %v213, %v237
    %v249 = vadd.f32 %v214, %v240
    %v250 = vadd.f32 %v215, %v242
    %v251 = vld [vmem:[#allocation2] sm:$0x1]
    %v253 = vlaneseq
    %v254 = vshrl.u32 %v253, 7
    %v255 = vsub.s32 0, %v254
    %v256 = vrot.slane %v251, %v255
    %v258 = vadd.f32 %v247, %v256
    %v259 = vadd.f32 %v248, %v256
    %v260 = vadd.f32 %v249, %v256
    %v261 = vadd.f32 %v250, %v256
    %v262 = vmax.f32 %v258, 0.0
    %v263 = vmax.f32 %v259, 0.0
    %v264 = vmax.f32 %v260, 0.0
    %v265 = vmax.f32 %v261, 0.0
    %v270 = vcombine.high %v262, %v262
    %v272 = vunpack.c.l.s4 1983009808
    %v273 = vunpack.c.0.s8 %v272
    %v274 = vlaneseq
    %v275 = vshrl.u32 %v274, 7
    %v276 = vsub.s32 %v273, %v275
    %v277 = vrot.slane %v262, %v276
    %v279 = vunpack.c.l.s4 1983009808
    %v280 = vunpack.c.0.s8 %v279
    %v281 = vlaneseq
    %v282 = vshrl.u32 %v281, 7
    %v283 = vsub.s32 %v280, %v282
    %v284 = vrot.slane %v270, %v283
    %v285 = vcombine.high %v277, %v277
    %v286 = vcombine.high %v284, %v284
    %v287 = vcombine.high %v263, %v263
    %v289 = vunpack.c.l.s4 1983009808
    %v290 = vunpack.c.0.s8 %v289
    %v291 = vlaneseq
    %v292 = vshrl.u32 %v291, 7
    %v293 = vsub.s32 %v290, %v292
    %v294 = vrot.slane %v263, %v293
    %v296 = vunpack.c.l.s4 1983009808
    %v297 = vunpack.c.0.s8 %v296
    %v298 = vlaneseq
    %v299 = vshrl.u32 %v298, 7
    %v300 = vsub.s32 %v297, %v299
    %v301 = vrot.slane %v287, %v300
    %v302 = vcombine.high %v294, %v294
    %v303 = vcombine.high %v301, %v301
    %v304 = vcombine.high %v264, %v264
    %v306 = vunpack.c.l.s4 1983009808
    %v307 = vunpack.c.0.s8 %v306
    %v308 = vlaneseq
    %v309 = vshrl.u32 %v308, 7
    %v310 = vsub.s32 %v307, %v309
    %v311 = vrot.slane %v264, %v310
    %v313 = vunpack.c.l.s4 1983009808
    %v314 = vunpack.c.0.s8 %v313
    %v315 = vlaneseq
    %v316 = vshrl.u32 %v315, 7
    %v317 = vsub.s32 %v314, %v316
    %v318 = vrot.slane %v304, %v317
    %v319 = vcombine.high %v311, %v311
    %v320 = vcombine.high %v318, %v318
    %v321 = vcombine.high %v265, %v265
    %v323 = vunpack.c.l.s4 1983009808
    %v324 = vunpack.c.0.s8 %v323
    %v325 = vlaneseq
    %v326 = vshrl.u32 %v325, 7
    %v327 = vsub.s32 %v324, %v326
    %v328 = vrot.slane %v265, %v327
    %v330 = vunpack.c.l.s4 1983009808
    %v331 = vunpack.c.0.s8 %v330
    %v332 = vlaneseq
    %v333 = vshrl.u32 %v332, 7
    %v334 = vsub.s32 %v331, %v333
    %v335 = vrot.slane %v321, %v334
    %v336 = vcombine.high %v328, %v328
    %v337 = vcombine.high %v335, %v335
    %vm354 = vcmask 123904
    %v355 = vsel %vm354, %v277, -inf
    %v356 = vrot.slane %v355, 4
    %v357 = vmax.f32 %v355, %v356
    %v358 = vrot.slane %v357, 2
    %v359 = vmax.f32 %v357, %v358
    %v360 = vrot.slane %v359, 1
    %v361 = vmax.f32 %v359, %v360
    %v362 = vsel %vm354, %v285, -inf
    %v363 = vrot.slane %v362, 4
    %v364 = vmax.f32 %v362, %v363
    %v365 = vrot.slane %v364, 2
    %v366 = vmax.f32 %v364, %v365
    %v367 = vrot.slane %v366, 1
    %v368 = vmax.f32 %v366, %v367
    %v369 = vsel %vm354, %v284, -inf
    %v370 = vrot.slane %v369, 4
    %v371 = vmax.f32 %v369, %v370
    %v372 = vrot.slane %v371, 2
    %v373 = vmax.f32 %v371, %v372
    %v374 = vrot.slane %v373, 1
    %v375 = vmax.f32 %v373, %v374
    %v376 = vsel %vm354, %v286, -inf
    %v377 = vrot.slane %v376, 4
    %v378 = vmax.f32 %v376, %v377
    %v379 = vrot.slane %v378, 2
    %v380 = vmax.f32 %v378, %v379
    %v381 = vrot.slane %v380, 1
    %v382 = vmax.f32 %v380, %v381
    %v383 = vsel %vm354, %v294, -inf
    %v384 = vrot.slane %v383, 4
    %v385 = vmax.f32 %v383, %v384
    %v386 = vrot.slane %v385, 2
    %v387 = vmax.f32 %v385, %v386
    %v388 = vrot.slane %v387, 1
    %v389 = vmax.f32 %v387, %v388
    %v390 = vsel %vm354, %v302, -inf
    %v391 = vrot.slane %v390, 4
    %v392 = vmax.f32 %v390, %v391
    %v393 = vrot.slane %v392, 2
    %v394 = vmax.f32 %v392, %v393
    %v395 = vrot.slane %v394, 1
    %v396 = vmax.f32 %v394, %v395
    %v397 = vsel %vm354, %v301, -inf
    %v398 = vrot.slane %v397, 4
    %v399 = vmax.f32 %v397, %v398
    %v400 = vrot.slane %v399, 2
    %v401 = vmax.f32 %v399, %v400
    %v402 = vrot.slane %v401, 1
    %v403 = vmax.f32 %v401, %v402
    %v404 = vsel %vm354, %v303, -inf
    %v405 = vrot.slane %v404, 4
    %v406 = vmax.f32 %v404, %v405
    %v407 = vrot.slane %v406, 2
    %v408 = vmax.f32 %v406, %v407
    %v409 = vrot.slane %v408, 1
    %v410 = vmax.f32 %v408, %v409
    %v411 = vsel %vm354, %v311, -inf
    %v412 = vrot.slane %v411, 4
    %v413 = vmax.f32 %v411, %v412
    %v414 = vrot.slane %v413, 2
    %v415 = vmax.f32 %v413, %v414
    %v416 = vrot.slane %v415, 1
    %v417 = vmax.f32 %v415, %v416
    %v418 = vsel %vm354, %v319, -inf
    %v419 = vrot.slane %v418, 4
    %v420 = vmax.f32 %v418, %v419
    %v421 = vrot.slane %v420, 2
    %v422 = vmax.f32 %v420, %v421
    %v423 = vrot.slane %v422, 1
    %v424 = vmax.f32 %v422, %v423
    %v425 = vsel %vm354, %v318, -inf
    %v426 = vrot.slane %v425, 4
    %v427 = vmax.f32 %v425, %v426
    %v428 = vrot.slane %v427, 2
    %v429 = vmax.f32 %v427, %v428
    %v430 = vrot.slane %v429, 1
    %v431 = vmax.f32 %v429, %v430
    %v432 = vsel %vm354, %v320, -inf
    %v433 = vrot.slane %v432, 4
    %v434 = vmax.f32 %v432, %v433
    %v435 = vrot.slane %v434, 2
    %v436 = vmax.f32 %v434, %v435
    %v437 = vrot.slane %v436, 1
    %v438 = vmax.f32 %v436, %v437
    %v439 = vsel %vm354, %v328, -inf
    %v440 = vrot.slane %v439, 4
    %v441 = vmax.f32 %v439, %v440
    %v442 = vrot.slane %v441, 2
    %v443 = vmax.f32 %v441, %v442
    %v444 = vrot.slane %v443, 1
    %v445 = vmax.f32 %v443, %v444
    %v446 = vsel %vm354, %v336, -inf
    %v447 = vrot.slane %v446, 4
    %v448 = vmax.f32 %v446, %v447
    %v449 = vrot.slane %v448, 2
    %v450 = vmax.f32 %v448, %v449
    %v451 = vrot.slane %v450, 1
    %v452 = vmax.f32 %v450, %v451
    %v453 = vsel %vm354, %v335, -inf
    %v454 = vrot.slane %v453, 4
    %v455 = vmax.f32 %v453, %v454
    %v456 = vrot.slane %v455, 2
    %v457 = vmax.f32 %v455, %v456
    %v458 = vrot.slane %v457, 1
    %v459 = vmax.f32 %v457, %v458
    %v460 = vsel %vm354, %v337, -inf
    %v461 = vrot.slane %v460, 4
    %v462 = vmax.f32 %v460, %v461
    %v463 = vrot.slane %v462, 2
    %v464 = vmax.f32 %v462, %v463
    %v465 = vrot.slane %v464, 1
    %v466 = vmax.f32 %v464, %v465
    %vm483 = vcmask 1043459
    %v484 = vsel %vm483, %v368, %v361
    %vm485 = vcmask 1044484
    %v486 = vsel %vm485, %v375, %v484
    %vm487 = vcmask 1045509
    %v488 = vsel %vm487, %v382, %v486
    %vm489 = vcmask 1046534
    %v490 = vsel %vm489, %v389, %v488
    %vm491 = vcmask 1047559
    %v492 = vsel %vm491, %v396, %v490
    %vm493 = vcmask 1041409
    %v494 = vsel %vm493, %v410, %v403
    %v495 = vsel %vm483, %v424, %v417
    %v496 = vsel %vm485, %v431, %v495
    %v497 = vsel %vm487, %v438, %v496
    %v498 = vsel %vm489, %v445, %v497
    %v499 = vsel %vm491, %v452, %v498
    %v500 = vsel %vm493, %v466, %v459
    %vm505 = vcmask 1041408
    %v506 = vsel %vm505, 0.0, %v492
    %v507 = vsel %vm505, 0.0, %v499
    %v508 = vsel %vm505, %v494, 0.0
    %v509 = vsel %vm505, %v500, 0.0
    %v514 = vrot.slane %v506, 1
    %v515 = vrot.slane %v508, 1
    %v516 = vsel %vm127, %v514, %v515
    %v517 = vrot.slane %v507, 1
    %v518 = vrot.slane %v509, 1
    %v519 = vsel %vm127, %v517, %v518
    %520 = vrot.lane.b32.xlu0 %v516, 16
    %v521 = vpop.permute.xlu0 %520
    %522 = vrot.lane.b32.xlu0 %v519, 16
    %v523 = vpop.permute.xlu0 %522
    %v526 = vrot.slane %v506, 2
    %v527 = vrot.slane %v508, 2
    %v528 = vsel %vm162, %v526, %v527
    %v529 = vrot.slane %v507, 2
    %v530 = vrot.slane %v509, 2
    %v531 = vsel %vm162, %v529, %v530
    %532 = vrot.lane.b32.xlu0 %v528, 32
    %v533 = vpop.permute.xlu0 %532
    %534 = vrot.lane.b32.xlu0 %v531, 32
    %v535 = vpop.permute.xlu0 %534
    %v538 = vrot.slane %v506, 3
    %v539 = vrot.slane %v508, 3
    %v540 = vsel %vm197, %v538, %v539
    %v541 = vrot.slane %v507, 3
    %v542 = vrot.slane %v509, 3
    %v543 = vsel %vm197, %v541, %v542
    %544 = vrot.lane.b32.xlu0 %v540, 48
    %v545 = vpop.permute.xlu0 %544
    %546 = vrot.lane.b32.xlu0 %v543, 48
    %v547 = vpop.permute.xlu0 %546
    %v550 = vrot.slane %v506, 4
    %v551 = vrot.slane %v508, 4
    %v552 = vsel %vm232, %v550, %v551
    %v553 = vrot.slane %v507, 4
    %v554 = vrot.slane %v509, 4
    %v555 = vsel %vm232, %v553, %v554
    %556 = vrot.lane.b32.xlu0 %v552, 64
    %v557 = vpop.permute.xlu0 %556
    %558 = vrot.lane.b32.xlu0 %v555, 64
    %v559 = vpop.permute.xlu0 %558
    %vm562 = vcmask 130048
    %v563 = vsel %vm562, %v506, %v521
    %v564 = vsel %vm562, %v507, %v523
    %vm565 = vcmask 261120
    %v566 = vsel %vm565, %v563, %v533
    %v567 = vsel %vm565, %v564, %v535
    %vm568 = vcmask 392192
    %v569 = vsel %vm568, %v566, %v545
    %v570 = vsel %vm568, %v567, %v547
    %vm571 = vcmask 523264
    %v572 = vsel %vm571, %v569, %v557
    %v573 = vsel %vm571, %v570, %v559
    %v574 = vpack.c.bf16 %v573, %v572
    %v575 = vld [vmem:[%s3] sm:$0xf]
    %v576 = vld [vmem:[%s3 + $0x4] sm:$0xf]
    %v577 = vld [vmem:[%s3 + $0x8] sm:$0xf]
    %v578 = vld [vmem:[%s3 + $0xc] sm:$0xf]
    %v579 = vld [vmem:[%s3 + $0x10] sm:$0xf]
    %v580 = vld [vmem:[%s3 + $0x14] sm:$0xf]
    %v581 = vld [vmem:[%s3 + $0x18] sm:$0xf]
    %v582 = vld [vmem:[%s3 + $0x1c] sm:$0xf]
    %v583 = vld [vmem:[%s3 + $0x20] sm:$0xf]
    %v584 = vld [vmem:[%s3 + $0x24] sm:$0xf]
    %v585 = vld [vmem:[#allocation5] sm:$0x1]
    %v587 = vlaneseq
    %v588 = vshrl.u32 %v587, 7
    %v589 = vsub.s32 0, %v588
    %v590 = vrot.slane %v585, %v589
    %v602 = vunpack.c.l.b16 %v575
    %v603 = vunpack.c.l.b16 %v576
    %v604 = vunpack.c.l.b16 %v577
    %v605 = vunpack.c.l.b16 %v578
    %v606 = vunpack.c.l.b16 %v579
    %v607 = vunpack.c.l.b16 %v580
    %v608 = vunpack.c.l.b16 %v581
    %v609 = vunpack.c.l.b16 %v582
    %v610 = vunpack.c.l.b16 %v583
    %v611 = vunpack.c.l.b16 %v584
    %v612 = vpack.c.b16 %v603, %v602
    %v613 = vpack.c.b16 %v605, %v604
    %v614 = vpack.c.b16 %v607, %v606
    %v615 = vpack.c.b16 %v609, %v608
    %v616 = vpack.c.b16 %v611, %v610
    %vm622 = vcmask 654336
    %v624 = vsel %vm622, %v574, 0
    %626 = vmatprep.subr.bf16.mxu0 0
    %627 = vmatpush1.bf16.msra.mxu0 %v612
    %628 = vmatprep.subr.bf16.mxu0 0
    %629 = vmatpush1.bf16.msra.mxu0 %v613
    %630 = vmatprep.subr.bf16.mxu0 0
    %631 = vmatpush1.bf16.msra.mxu0 %v614
    %632 = vmatprep.subr.bf16.mxu0 0
    %633 = vmatpush1.bf16.msra.mxu0 %v615
    %634 = vmatprep.subr.bf16.mxu0 0
    %635 = vmatpush1.bf16.msra.mxu0 %v616
    %636 = vmatprep.subr.bf16.mxu0 0
    %637 = vmatpush1.bf16.msra.mxu0 0
    %638 = vmatprep.subr.bf16.mxu0 0
    %639 = vmatpush1.bf16.msra.mxu0 0
    %640 = vmatprep.subr.bf16.mxu0 0
    %641 = vmatpush1.bf16.msra.mxu0 0
    %642 = vmatprep.subr.bf16.mxu0 0
    %643 = vmatpush1.bf16.msra.mxu0 0
    %644 = vmatprep.subr.bf16.mxu0 0
    %645 = vmatpush1.bf16.msra.mxu0 0
    %646 = vmatprep.subr.bf16.mxu0 0
    %647 = vmatpush1.bf16.msra.mxu0 0
    %648 = vmatprep.subr.bf16.mxu0 0
    %649 = vmatpush1.bf16.msra.mxu0 0
    %650 = vmatprep.subr.bf16.mxu0 0
    %651 = vmatpush1.bf16.msra.mxu0 0
    %652 = vmatprep.subr.bf16.mxu0 0
    %653 = vmatpush1.bf16.msra.mxu0 0
    %654 = vmatprep.subr.bf16.mxu0 0
    %655 = vmatpush1.bf16.msra.mxu0 0
    %656 = vmatprep.subr.bf16.mxu0 0
    %657 = vmatpush1.bf16.msra.mxu0 0
    %658 = vmatprep.mubr.bf16.mxu0 0
    %659 = vmatmul.mubr.bf16.gmra.mrb[0].mxu0 %v624
    %v660 = vpop.f32.mrb[0].mxu0
    %v661 = vadd.f32 %v590, %v660
    %v662 = vpop.f32.mrb[0].mxu0
    %v663 = vpop.f32.mrb[0].mxu0
    %v664 = vadd.f32 %v590, %v663
    %v665 = vpop.f32.mrb[0].mxu0
    %666 = vdwg.mxu0
    %v667 = vmax.f32 %v661, 0.0
    %v668 = vmax.f32 %v664, 0.0
    %v671 = vcombine.high %v667, %v667
    %v673 = vunpack.c.l.s4 1983009808
    %v674 = vunpack.c.0.s8 %v673
    %v675 = vlaneseq
    %v676 = vshrl.u32 %v675, 7
    %v677 = vsub.s32 %v674, %v676
    %v678 = vrot.slane %v667, %v677
    %v680 = vunpack.c.l.s4 1983009808
    %v681 = vunpack.c.0.s8 %v680
    %v682 = vlaneseq
    %v683 = vshrl.u32 %v682, 7
    %v684 = vsub.s32 %v681, %v683
    %v685 = vrot.slane %v671, %v684
    %v686 = vcombine.high %v678, %v678
    %v687 = vcombine.high %v685, %v685
    %v688 = vcombine.high %v668, %v668
    %v690 = vunpack.c.l.s4 1983009808
    %v691 = vunpack.c.0.s8 %v690
    %v692 = vlaneseq
    %v693 = vshrl.u32 %v692, 7
    %v694 = vsub.s32 %v691, %v693
    %v695 = vrot.slane %v668, %v694
    %v697 = vunpack.c.l.s4 1983009808
    %v698 = vunpack.c.0.s8 %v697
    %v699 = vlaneseq
    %v700 = vshrl.u32 %v699, 7
    %v701 = vsub.s32 %v698, %v700
    %v702 = vrot.slane %v688, %v701
    %v703 = vcombine.high %v695, %v695
    %v704 = vcombine.high %v702, %v702
    %vm713 = vcmask 254976
    %v714 = vsel %vm713, %v678, -inf
    %v715 = vrot.slane %v714, 4
    %v716 = vmax.f32 %v714, %v715
    %v717 = vrot.slane %v716, 2
    %v718 = vmax.f32 %v716, %v717
    %v719 = vrot.slane %v718, 1
    %v720 = vmax.f32 %v718, %v719
    %v721 = vsel %vm713, %v686, -inf
    %v722 = vrot.slane %v721, 4
    %v723 = vmax.f32 %v721, %v722
    %v724 = vrot.slane %v723, 2
    %v725 = vmax.f32 %v723, %v724
    %v726 = vrot.slane %v725, 1
    %v727 = vmax.f32 %v725, %v726
    %v728 = vsel %vm713, %v685, -inf
    %v729 = vrot.slane %v728, 4
    %v730 = vmax.f32 %v728, %v729
    %v731 = vrot.slane %v730, 2
    %v732 = vmax.f32 %v730, %v731
    %v733 = vrot.slane %v732, 1
    %v734 = vmax.f32 %v732, %v733
    %v735 = vsel %vm713, %v687, -inf
    %v736 = vrot.slane %v735, 4
    %v737 = vmax.f32 %v735, %v736
    %v738 = vrot.slane %v737, 2
    %v739 = vmax.f32 %v737, %v738
    %v740 = vrot.slane %v739, 1
    %v741 = vmax.f32 %v739, %v740
    %v742 = vsel %vm713, %v695, -inf
    %v743 = vrot.slane %v742, 4
    %v744 = vmax.f32 %v742, %v743
    %v745 = vrot.slane %v744, 2
    %v746 = vmax.f32 %v744, %v745
    %v747 = vrot.slane %v746, 1
    %v748 = vmax.f32 %v746, %v747
    %v749 = vsel %vm713, %v703, -inf
    %v750 = vrot.slane %v749, 4
    %v751 = vmax.f32 %v749, %v750
    %v752 = vrot.slane %v751, 2
    %v753 = vmax.f32 %v751, %v752
    %v754 = vrot.slane %v753, 1
    %v755 = vmax.f32 %v753, %v754
    %v756 = vsel %vm713, %v702, -inf
    %v757 = vrot.slane %v756, 4
    %v758 = vmax.f32 %v756, %v757
    %v759 = vrot.slane %v758, 2
    %v760 = vmax.f32 %v758, %v759
    %v761 = vrot.slane %v760, 1
    %v762 = vmax.f32 %v760, %v761
    %v763 = vsel %vm713, %v704, -inf
    %v764 = vrot.slane %v763, 4
    %v765 = vmax.f32 %v763, %v764
    %v766 = vrot.slane %v765, 2
    %v767 = vmax.f32 %v765, %v766
    %v768 = vrot.slane %v767, 1
    %v769 = vmax.f32 %v767, %v768
    %v778 = vsel %vm493, %v727, %v720
    %vm779 = vcmask 1042434
    %v780 = vsel %vm779, %v734, %v778
    %v781 = vsel %vm483, %v741, %v780
    %v782 = vsel %vm493, %v755, %v748
    %v783 = vsel %vm779, %v762, %v782
    %v784 = vsel %vm483, %v769, %v783
    %v787 = vunpack.c.l.s4 1983009808
    %v788 = vunpack.c.0.s8 %v787
    %v789 = vlaneseq
    %v790 = vshrl.u32 %v789, 7
    %v791 = vsub.s32 %v788, %v790
    %v792 = vrot.slane %v781, %v791
    %v795 = vunpack.c.l.s4 1983009808
    %v796 = vunpack.c.0.s8 %v795
    %v797 = vlaneseq
    %v798 = vshrl.u32 %v797, 7
    %v799 = vsub.s32 %v796, %v798
    %v800 = vrot.slane %v784, %v799
    %v801 = vcombine.low %v792, %v800
    %v802 = vcombine.high %v792, %v800
    %v804 = vunpack.c.l.s4 1934713408
    %v805 = vunpack.c.0.s8 %v804
    %v806 = vlaneseq
    %v807 = vshrl.u32 %v806, 7
    %v808 = vsub.s32 %v805, %v807
    %v809 = vrot.slane %v801, %v808
    %v811 = vunpack.c.l.s4 1934713408
    %v812 = vunpack.c.0.s8 %v811
    %v813 = vlaneseq
    %v814 = vshrl.u32 %v813, 7
    %v815 = vsub.s32 %v812, %v814
    %v816 = vrot.slane %v802, %v815
    %v817 = vcombine.high %v809, 0.0
    %v818 = vcombine.high %v816, 0.0
    %820 = vrot.lane.b32.xlu0 %v817, 32
    %v821 = vpop.permute.xlu0 %820
    %824 = vrot.lane.b32.xlu0 %v816, 64
    %v825 = vpop.permute.xlu0 %824
    %828 = vrot.lane.b32.xlu0 %v818, 96
    %v829 = vpop.permute.xlu0 %828
    %v831 = vsel %vm565, %v809, %v821
    %v832 = vsel %vm571, %v831, %v825
    %vm833 = vcmask 785408
    %v834 = vsel %vm833, %v832, %v829
    %v835 = vpack.c.bf16 %v834, %v834
    %v836 = vld [vmem:[%s5] sm:$0xf]
    %v837 = vld [vmem:[%s5 + $0x4] sm:$0xf]
    %v838 = vld [vmem:[%s5 + $0x8] sm:$0xf]
    %v839 = vld [vmem:[%s5 + $0xc] sm:$0xf]
    %v840 = vld [vmem:[%s5 + $0x10] sm:$0xf]
    %v841 = vld [vmem:[%s5 + $0x14] sm:$0xf]
    %v842 = vld [vmem:[%s5 + $0x18] sm:$0xf]
    %v843 = vld [vmem:[%s5 + $0x1c] sm:$0xf]
    %v844 = vld [vmem:[%s5 + $0x20] sm:$0xf]
    %v845 = vld [vmem:[%s5 + $0x24] sm:$0xf]
    %v846 = vld [vmem:[%s5 + $0x28] sm:$0xf]
    %v847 = vld [vmem:[%s5 + $0x2c] sm:$0xf]
    %v848 = vld [vmem:[%s5 + $0x30] sm:$0xf]
    %v849 = vld [vmem:[%s5 + $0x34] sm:$0xf]
    %v850 = vld [vmem:[%s5 + $0x38] sm:$0xf]
    %v851 = vld [vmem:[%s5 + $0x3c] sm:$0xf]
    %v852 = vld [vmem:[%s6] sm:$0x1]
    %v854 = vlaneseq
    %v855 = vshrl.u32 %v854, 7
    %v856 = vsub.s32 0, %v855
    %v857 = vrot.slane %v852, %v856
    %v875 = vunpack.c.l.b16 %v836
    %v876 = vunpack.c.l.b16 %v837
    %v877 = vunpack.c.l.b16 %v838
    %v878 = vunpack.c.l.b16 %v839
    %v879 = vunpack.c.l.b16 %v840
    %v880 = vunpack.c.l.b16 %v841
    %v881 = vunpack.c.l.b16 %v842
    %v882 = vunpack.c.l.b16 %v843
    %v883 = vunpack.c.l.b16 %v844
    %v884 = vunpack.c.l.b16 %v845
    %v885 = vunpack.c.l.b16 %v846
    %v886 = vunpack.c.l.b16 %v847
    %v887 = vunpack.c.l.b16 %v848
    %v888 = vunpack.c.l.b16 %v849
    %v889 = vunpack.c.l.b16 %v850
    %v890 = vunpack.c.l.b16 %v851
    %v891 = vpack.c.b16 %v876, %v875
    %v892 = vpack.c.b16 %v878, %v877
    %v893 = vpack.c.b16 %v880, %v879
    %v894 = vpack.c.b16 %v882, %v881
    %v895 = vpack.c.b16 %v884, %v883
    %v896 = vpack.c.b16 %v886, %v885
    %v897 = vpack.c.b16 %v888, %v887
    %v898 = vpack.c.b16 %v890, %v889
    %907 = vmatprep.subr.bf16.mxu0 0
    %908 = vmatpush1.bf16.msra.mxu0 %v891
    %909 = vmatprep.subr.bf16.mxu0 0
    %910 = vmatpush1.bf16.msra.mxu0 %v892
    %911 = vmatprep.subr.bf16.mxu0 0
    %912 = vmatpush1.bf16.msra.mxu0 %v893
    %913 = vmatprep.subr.bf16.mxu0 0
    %914 = vmatpush1.bf16.msra.mxu0 %v894
    %915 = vmatprep.subr.bf16.mxu0 0
    %916 = vmatpush1.bf16.msra.mxu0 %v895
    %917 = vmatprep.subr.bf16.mxu0 0
    %918 = vmatpush1.bf16.msra.mxu0 %v896
    %919 = vmatprep.subr.bf16.mxu0 0
    %920 = vmatpush1.bf16.msra.mxu0 %v897
    %921 = vmatprep.subr.bf16.mxu0 0
    %922 = vmatpush1.bf16.msra.mxu0 %v898
    %923 = vmatprep.subr.bf16.mxu0 0
    %924 = vmatpush1.bf16.msra.mxu0 0
    %925 = vmatprep.subr.bf16.mxu0 0
    %926 = vmatpush1.bf16.msra.mxu0 0
    %927 = vmatprep.subr.bf16.mxu0 0
    %928 = vmatpush1.bf16.msra.mxu0 0
    %929 = vmatprep.subr.bf16.mxu0 0
    %930 = vmatpush1.bf16.msra.mxu0 0
    %931 = vmatprep.subr.bf16.mxu0 0
    %932 = vmatpush1.bf16.msra.mxu0 0
    %933 = vmatprep.subr.bf16.mxu0 0
    %934 = vmatpush1.bf16.msra.mxu0 0
    %935 = vmatprep.subr.bf16.mxu0 0
    %936 = vmatpush1.bf16.msra.mxu0 0
    %937 = vmatprep.subr.bf16.mxu0 0
    %938 = vmatpush1.bf16.msra.mxu0 0
    %939 = vmatprep.mubr.bf16.mxu0 0
    %940 = vmatmul.mubr.bf16.gmra.mrb[0].mxu0 %v835
    %v941 = vpop.f32.mrb[0].mxu0
    %v942 = vadd.f32 %v857, %v941
    %v943 = vpop.f32.mrb[0].mxu0
    %v944 = vpop.f32.mrb[0].mxu0
    %v945 = vpop.f32.mrb[0].mxu0
    %946 = vdwg.mxu0
    %v947 = vmax.f32 %v942, 0.0
    %v948 = vpack.c.bf16 %v947, %v947
    %v949 = vld [vmem:[#allocation7] sm:$0xf]
    %v950 = vld [vmem:[#allocation7 + $0x4] sm:$0xf]
    %v951 = vld [vmem:[#allocation7 + $0x8] sm:$0xf]
    %v952 = vld [vmem:[#allocation7 + $0xc] sm:$0xf]
    %v953 = vld [vmem:[#allocation7 + $0x10] sm:$0xf]
    %v954 = vld [vmem:[#allocation7 + $0x14] sm:$0xf]
    %v955 = vld [vmem:[#allocation7 + $0x18] sm:$0xf]
    %v956 = vld [vmem:[#allocation7 + $0x1c] sm:$0xf]
    %v957 = vld [vmem:[#allocation7 + $0x20] sm:$0xf]
    %v958 = vld [vmem:[#allocation7 + $0x24] sm:$0xf]
    %v959 = vld [vmem:[#allocation7 + $0x28] sm:$0xf]
    %v960 = vld [vmem:[#allocation7 + $0x2c] sm:$0xf]
    %v961 = vld [vmem:[#allocation7 + $0x30] sm:$0xf]
    %v962 = vld [vmem:[#allocation7 + $0x34] sm:$0xf]
    %v963 = vld [vmem:[#allocation7 + $0x38] sm:$0xf]
    %v964 = vld [vmem:[#allocation7 + $0x3c] sm:$0xf]
    %v965 = vld [vmem:[%s8] sm:$0x1]
    %v967 = vlaneseq
    %v968 = vshrl.u32 %v967, 7
    %v969 = vsub.s32 0, %v968
    %v970 = vrot.slane %v965, %v969
    %v988 = vunpack.c.l.b16 %v949
    %v989 = vunpack.c.l.b16 %v950
    %v990 = vunpack.c.l.b16 %v951
    %v991 = vunpack.c.l.b16 %v952
    %v992 = vunpack.c.l.b16 %v953
    %v993 = vunpack.c.l.b16 %v954
    %v994 = vunpack.c.l.b16 %v955
    %v995 = vunpack.c.l.b16 %v956
    %v996 = vunpack.c.l.b16 %v957
    %v997 = vunpack.c.l.b16 %v958
    %v998 = vunpack.c.l.b16 %v959
    %v999 = vunpack.c.l.b16 %v960
    %v1000 = vunpack.c.l.b16 %v961
    %v1001 = vunpack.c.l.b16 %v962
    %v1002 = vunpack.c.l.b16 %v963
    %v1003 = vunpack.c.l.b16 %v964
    %v1004 = vpack.c.b16 %v989, %v988
    %v1005 = vpack.c.b16 %v991, %v990
    %v1006 = vpack.c.b16 %v993, %v992
    %v1007 = vpack.c.b16 %v995, %v994
    %v1008 = vpack.c.b16 %v997, %v996
    %v1009 = vpack.c.b16 %v999, %v998
    %v1010 = vpack.c.b16 %v1001, %v1000
    %v1011 = vpack.c.b16 %v1003, %v1002
    %1020 = vmatprep.subr.bf16.mxu0 0
    %1021 = vmatpush1.bf16.msra.mxu0 %v1004
    %1022 = vmatprep.subr.bf16.mxu0 0
    %1023 = vmatpush1.bf16.msra.mxu0 %v1005
    %1024 = vmatprep.subr.bf16.mxu0 0
    %1025 = vmatpush1.bf16.msra.mxu0 %v1006
    %1026 = vmatprep.subr.bf16.mxu0 0
    %1027 = vmatpush1.bf16.msra.mxu0 %v1007
    %1028 = vmatprep.subr.bf16.mxu0 0
    %1029 = vmatpush1.bf16.msra.mxu0 %v1008
    %1030 = vmatprep.subr.bf16.mxu0 0
    %1031 = vmatpush1.bf16.msra.mxu0 %v1009
    %1032 = vmatprep.subr.bf16.mxu0 0
    %1033 = vmatpush1.bf16.msra.mxu0 %v1010
    %1034 = vmatprep.subr.bf16.mxu0 0
    %1035 = vmatpush1.bf16.msra.mxu0 %v1011
    %1036 = vmatprep.subr.bf16.mxu0 0
    %1037 = vmatpush1.bf16.msra.mxu0 0
    %1038 = vmatprep.subr.bf16.mxu0 0
    %1039 = vmatpush1.bf16.msra.mxu0 0
    %1040 = vmatprep.subr.bf16.mxu0 0
    %1041 = vmatpush1.bf16.msra.mxu0 0
    %1042 = vmatprep.subr.bf16.mxu0 0
    %1043 = vmatpush1.bf16.msra.mxu0 0
    %1044 = vmatprep.subr.bf16.mxu0 0
    %1045 = vmatpush1.bf16.msra.mxu0 0
    %1046 = vmatprep.subr.bf16.mxu0 0
    %1047 = vmatpush1.bf16.msra.mxu0 0
    %1048 = vmatprep.subr.bf16.mxu0 0
    %1049 = vmatpush1.bf16.msra.mxu0 0
    %1050 = vmatprep.subr.bf16.mxu0 0
    %1051 = vmatpush1.bf16.msra.mxu0 0
    %1052 = vmatprep.mubr.bf16.mxu0 0
    %1053 = vmatmul.mubr.bf16.gmra.mrb[0].mxu0 %v948
    %v1054 = vpop.f32.mrb[0].mxu0
    %v1055 = vadd.f32 %v970, %v1054
    %v1056 = vpop.f32.mrb[0].mxu0
    %v1057 = vpop.f32.mrb[0].mxu0
    %v1058 = vpop.f32.mrb[0].mxu0
    %1059 = vdwg.mxu0
    %1060 = vst [vmem:[#allocation8] sm:$0x3] %v1055
    // Predicated region
    $region50: #{tpu_custom_call.1} parent=1 // pred_check
      _
    $region51: #{tpu_custom_call.1} parent=1 // pred_check_branch
      %1062 = sbr.rel (0) target = $region53
    $region52: #{tpu_custom_call.1} parent=1 // pred_region
      %s1064 = ssub.s32 32, 32
      %1065 = vsyncadd [#allocation4], %s1064
      %s1067 = sshll.u32 [#allocation8], 4
      %s1068 = int_to_ptr.vmem [resolvable:$true] %s1067
      %1070 = dma.vmem_to_hbm [thread:$0]  %s1068, 32, %s9, [#allocation4]
    $region53: #{tpu_custom_call.1} parent=1 // pred_fallthru
      _
    // Predicated region
    $region54: #{tpu_custom_call.1} parent=1 // pred_check
      _
    $region55: #{tpu_custom_call.1} parent=1 // pred_check_branch
      %1072 = sbr.rel (0) target = $region57
    $region56: #{tpu_custom_call.1} parent=1 // pred_region
      %1073 = dma.done [#allocation4], 32
    $region57: #{tpu_custom_call.1} parent=1 // pred_fallthru
      _
    %1074 = vsyncpa [#allocation3], 1
    %1075 = vsyncpa [#allocation6], 1
    %1076 = vsyncpa [#allocation4], 1

// kernel: tpu_custom_call.1
$region0: #{tpu_custom_call.1}
  #allocation0 [shape = 'u32[]', space=smem, size = 0x4, offset = 0x4, fixed_abs, tag = 'smem constant byte address 0x4 - core index']
  #allocation1 [shape = 'u32[144,128]{1,0:T(1,128)}', space=vmem, size = 0x12000, scoped, tag = 'internal scratch']
  %s0 = inlined_call_operand.vmem [shape: f32[2,20], index: 0, kind: input, shape index: {}]
  %s1 = inlined_call_operand.vmem [shape: f32[5,16], index: 1, kind: input, shape index: {}]
  %s2 = inlined_call_operand.hbm [shape: f32[1,16], index: 2, kind: input, shape index: {}]
  %s3 = inlined_call_operand.vmem [shape: bf16[80,32], index: 3, kind: input, shape index: {}]
  %s4 = inlined_call_operand.hbm [shape: f32[1,32], index: 4, kind: input, shape index: {}]
  %s5 = inlined_call_operand.vmem [shape: bf16[128,128], index: 5, kind: input, shape index: {}]
  %s6 = inlined_call_operand.vmem [shape: f32[1,128], index: 6, kind: input, shape index: {}]
  %s7 = inlined_call_operand.hbm [shape: bf16[128,128], index: 7, kind: input, shape index: {}]
  %s8 = inlined_call_operand.vmem [shape: f32[1,128], index: 8, kind: input, shape index: {}]
  %s9 = inlined_call_operand.hbm [shape: f32[2,128], index: 9, kind: output, shape index: {}]
  %s10 = sld [smem:[#allocation0]]
  $region58: #{tpu_custom_call.1} parent=0
    _
  %s12 = ssub.s32 1, %s10
  %s13 = scalar_select 0, %s12, %s10
  $region1: #{tpu_custom_call.1} parent=0
    #allocation2 [shape = 'u8[512]{0}', space=vmem, size = 0x400, scoped, tag = 'input window, operand 2, single buffered']
    #allocation3 [shape = 's32[1]{0}', space=sflag, size = 0x4, scoped, tag = 'scoped memory for tpu_custom_call.1']
    #allocation4 [shape = 's32[1]{0}', space=sflag, size = 0x4, scoped, tag = 'scoped memory for tpu_custom_call.1']
    #allocation5 [shape = 'u8[512]{0}', space=vmem, size = 0x400, scoped, tag = 'input window, operand 4, single buffered']
    #allocation6 [shape = 's32[1]{0}', space=sflag, size = 0x4, scoped, tag = 'scoped memory for tpu_custom_call.1']
    #allocation7 [shape = 'u8[32768]{0}', space=vmem, size = 0x8000, scoped, tag = 'input window, operand 7, single buffered']
    #allocation8 [shape = 'u8[1024]{0}', space=vmem, size = 0x400, scoped, tag = 'output window, operand 0, single buffered']
    %14 = vsyncpa [#allocation3], 0
    %15 = vsyncpa [#allocation6], 0
    %16 = vsyncpa [#allocation4], 0
    // Predicated region
    $region2: #{tpu_custom_call.1} parent=1 // pred_check
      _
    $region3: #{tpu_custom_call.1} parent=1 // pred_check_branch
      %18 = sbr.rel (0) target = $region5
    $region4: #{tpu_custom_call.1} parent=1 // pred_region
      _
    $region5: #{tpu_custom_call.1} parent=1 // pred_fallthru
      _
    // Predicated region
    $region6: #{tpu_custom_call.1} parent=1 // pred_check
      _
    $region7: #{tpu_custom_call.1} parent=1 // pred_check_branch
      %20 = sbr.rel (0) target = $region9
    $region8: #{tpu_custom_call.1} parent=1 // pred_region
      _
    $region9: #{tpu_custom_call.1} parent=1 // pred_fallthru
      _
    // Predicated region
    $region10: #{tpu_custom_call.1} parent=1 // pred_check
      _
    $region11: #{tpu_custom_call.1} parent=1 // pred_check_branch
      %22 = sbr.rel (0) target = $region13
    $region12: #{tpu_custom_call.1} parent=1 // pred_region
      %s24 = ssub.s32 16, 16
      %25 = vsyncadd [#allocation3], %s24
      %s27 = sshll.u32 [#allocation2], 4
      %s28 = int_to_ptr.vmem [resolvable:$true] %s27
      %30 = dma.hbm_to_vmem [thread:$0]  %s2, 16, %s28, [#allocation3]
    $region13: #{tpu_custom_call.1} parent=1 // pred_fallthru
      _
    // Predicated region
    $region14: #{tpu_custom_call.1} parent=1 // pred_check
      _
    $region15: #{tpu_custom_call.1} parent=1 // pred_check_branch
      %32 = sbr.rel (0) target = $region17
    $region16: #{tpu_custom_call.1} parent=1 // pred_region
      _
    $region17: #{tpu_custom_call.1} parent=1 // pred_fallthru
      _
    // Predicated region
    $region18: #{tpu_custom_call.1} parent=1 // pred_check
      _
    $region19: #{tpu_custom_call.1} parent=1 // pred_check_branch
      %34 = sbr.rel (0) target = $region21
    $region20: #{tpu_custom_call.1} parent=1 // pred_region
      %s36 = ssub.s32 16, 16
      %37 = vsyncadd [#allocation6], %s36
      %s39 = sshll.u32 [#allocation5], 4
      %s40 = int_to_ptr.vmem [resolvable:$true] %s39
      %42 = dma.hbm_to_vmem [thread:$0]  %s4, 16, %s40, [#allocation6]
    $region21: #{tpu_custom_call.1} parent=1 // pred_fallthru
      _
    // Predicated region
    $region22: #{tpu_custom_call.1} parent=1 // pred_check
      _
    $region23: #{tpu_custom_call.1} parent=1 // pred_check_branch
      %44 = sbr.rel (0) target = $region25
    $region24: #{tpu_custom_call.1} parent=1 // pred_region
      _
    $region25: #{tpu_custom_call.1} parent=1 // pred_fallthru
      _
    // Predicated region
    $region26: #{tpu_custom_call.1} parent=1 // pred_check
      _
    $region27: #{tpu_custom_call.1} parent=1 // pred_check_branch
      %46 = sbr.rel (0) target = $region29
    $region28: #{tpu_custom_call.1} parent=1 // pred_region
      _
    $region29: #{tpu_custom_call.1} parent=1 // pred_fallthru
      _
    // Predicated region
    $region30: #{tpu_custom_call.1} parent=1 // pred_check
      _
    $region31: #{tpu_custom_call.1} parent=1 // pred_check_branch
      %48 = sbr.rel (0) target = $region33
    $region32: #{tpu_custom_call.1} parent=1 // pred_region
      %s50 = ssub.s32 1024, 1024
      %51 = vsyncadd [#allocation6], %s50
      %s52 = sshll.u32 [#allocation7], 4
      %s53 = int_to_ptr.vmem [resolvable:$true] %s52
      %58 = dma.hbm_to_vmem [thread:$0]  %s7, 1024, %s53, [#allocation6], 64, 64, 4
    $region33: #{tpu_custom_call.1} parent=1 // pred_fallthru
      _
    // Predicated region
    $region34: #{tpu_custom_call.1} parent=1 // pred_check
      _
    $region35: #{tpu_custom_call.1} parent=1 // pred_check_branch
      %60 = sbr.rel (0) target = $region37
    $region36: #{tpu_custom_call.1} parent=1 // pred_region
      _
    $region37: #{tpu_custom_call.1} parent=1 // pred_fallthru
      _
    // Predicated region
    $region38: #{tpu_custom_call.1} parent=1 // pred_check
      _
    $region39: #{tpu_custom_call.1} parent=1 // pred_check_branch
      %62 = sbr.rel (0) target = $region41
    $region40: #{tpu_custom_call.1} parent=1 // pred_region
      %63 = dma.done [#allocation3], 16
    $region41: #{tpu_custom_call.1} parent=1 // pred_fallthru
      _
    // Predicated region
    $region42: #{tpu_custom_call.1} parent=1 // pred_check
      _
    $region43: #{tpu_custom_call.1} parent=1 // pred_check_branch
      %65 = sbr.rel (0) target = $region45
    $region44: #{tpu_custom_call.1} parent=1 // pred_region
      %66 = dma.done [#allocation6], 16
    $region45: #{tpu_custom_call.1} parent=1 // pred_fallthru
      _
    // Predicated region
    $region46: #{tpu_custom_call.1} parent=1 // pred_check
      _
    $region47: #{tpu_custom_call.1} parent=1 // pred_check_branch
      %68 = sbr.rel (0) target = $region49
    $region48: #{tpu_custom_call.1} parent=1 // pred_region
      %69 = dma.done [#allocation6], 1024
    $region49: #{tpu_custom_call.1} parent=1 // pred_fallthru
      _
    %v71 = vld [vmem:[%s0] sm:$0x3]
    %v72 = vlaneseq
    %v73 = vshrl.u32 %v72, 7
    %v74 = vsub.s32 0, %v73
    %v75 = vrot.slane %v71, %v74
    %77 = vbcast.lane.b32.xlu0 %v75, 256
    %v78 = vpop.permute.xlu0 %77
    %s80 = sor.u32 256, 8
    %81 = vbcast.lane.b32.xlu0 %v75, %s80
    %v82 = vpop.permute.xlu0 %81
    %s84 = sor.u32 256, 16
    %85 = vbcast.lane.b32.xlu0 %v75, %s84
    %v86 = vpop.permute.xlu0 %85
    %v87 = vlaneseq
    %v88 = vshrl.u32 %v87, 7
    %v89 = vsub.s32 1, %v88
    %v90 = vrot.slane %v71, %v89
    %92 = vbcast.lane.b32.xlu0 %v90, 256
    %v93 = vpop.permute.xlu0 %92
    %s95 = sor.u32 256, 8
    %96 = vbcast.lane.b32.xlu0 %v90, %s95
    %v97 = vpop.permute.xlu0 %96
    %s99 = sor.u32 256, 16
    %100 = vbcast.lane.b32.xlu0 %v90, %s99
    %v101 = vpop.permute.xlu0 %100
    %v102 = vld [vmem:[%s1] sm:$0x1f]
    %v103 = vlaneseq
    %v104 = vshrl.u32 %v103, 7
    %v105 = vsub.s32 0, %v104
    %v106 = vrot.slane %v102, %v105
    %v107 = vmul.f32 %v78, %v106
    %v108 = vmul.f32 %v82, %v106
    %v109 = vmul.f32 %v93, %v106
    %v110 = vmul.f32 %v97, %v106
    %v111 = vlaneseq
    %v112 = vshrl.u32 %v111, 7
    %v113 = vsub.s32 1, %v112
    %v114 = vrot.slane %v102, %v113
    %v115 = vmul.f32 %v78, %v114
    %v116 = vmul.f32 %v82, %v114
    %v117 = vmul.f32 %v86, %v114
    %v118 = vmul.f32 %v93, %v114
    %v119 = vmul.f32 %v97, %v114
    %v120 = vmul.f32 %v101, %v114
    %vm127 = vcmask 1046528
    %v128 = vrot.slane %v115, 1
    %v129 = vrot.slane %v116, 1
    %v130 = vsel %vm127, %v128, %v129
    %v131 = vrot.slane %v117, 1
    %v132 = vsel %vm127, %v129, %v131
    %v133 = vrot.slane %v118, 1
    %v134 = vrot.slane %v119, 1
    %v135 = vsel %vm127, %v133, %v134
    %v136 = vrot.slane %v120, 1
    %v137 = vsel %vm127, %v134, %v136
    %v142 = vadd.f32 %v107, %v130
    %v143 = vadd.f32 %v108, %v132
    %v144 = vadd.f32 %v109, %v135
    %v145 = vadd.f32 %v110, %v137
    %v146 = vlaneseq
    %v147 = vshrl.u32 %v146, 7
    %v148 = vsub.s32 2, %v147
    %v149 = vrot.slane %v102, %v148
    %v150 = vmul.f32 %v78, %v149
    %v151 = vmul.f32 %v82, %v149
    %v152 = vmul.f32 %v86, %v149
    %v153 = vmul.f32 %v93, %v149
    %v154 = vmul.f32 %v97, %v149
    %v155 = vmul.f32 %v101, %v149
    %vm162 = vcmask 1045504
    %v163 = vrot.slane %v150, 2
    %v164 = vrot.slane %v151, 2
    %v165 = vsel %vm162, %v163, %v164
    %v166 = vrot.slane %v152, 2
    %v167 = vsel %vm162, %v164, %v166
    %v168 = vrot.slane %v153, 2
    %v169 = vrot.slane %v154, 2
    %v170 = vsel %vm162, %v168, %v169
    %v171 = vrot.slane %v155, 2
    %v172 = vsel %vm162, %v169, %v171
    %v177 = vadd.f32 %v142, %v165
    %v178 = vadd.f32 %v143, %v167
    %v179 = vadd.f32 %v144, %v170
    %v180 = vadd.f32 %v145, %v172
    %v181 = vlaneseq
    %v182 = vshrl.u32 %v181, 7
    %v183 = vsub.s32 3, %v182
    %v184 = vrot.slane %v102, %v183
    %v185 = vmul.f32 %v78, %v184
    %v186 = vmul.f32 %v82, %v184
    %v187 = vmul.f32 %v86, %v184
    %v188 = vmul.f32 %v93, %v184
    %v189 = vmul.f32 %v97, %v184
    %v190 = vmul.f32 %v101, %v184
    %vm197 = vcmask 1044480
    %v198 = vrot.slane %v185, 3
    %v199 = vrot.slane %v186, 3
    %v200 = vsel %vm197, %v198, %v199
    %v201 = vrot.slane %v187, 3
    %v202 = vsel %vm197, %v199, %v201
    %v203 = vrot.slane %v188, 3
    %v204 = vrot.slane %v189, 3
    %v205 = vsel %vm197, %v203, %v204
    %v206 = vrot.slane %v190, 3
    %v207 = vsel %vm197, %v204, %v206
    %v212 = vadd.f32 %v177, %v200
    %v213 = vadd.f32 %v178, %v202
    %v214 = vadd.f32 %v179, %v205
    %v215 = vadd.f32 %v180, %v207
    %v216 = vlaneseq
    %v217 = vshrl.u32 %v216, 7
    %v218 = vsub.s32 4, %v217
    %v219 = vrot.slane %v102, %v218
    %v220 = vmul.f32 %v78, %v219
    %v221 = vmul.f32 %v82, %v219
    %v222 = vmul.f32 %v86, %v219
    %v223 = vmul.f32 %v93, %v219
    %v224 = vmul.f32 %v97, %v219
    %v225 = vmul.f32 %v101, %v219
    %vm232 = vcmask 1043456
    %v233 = vrot.slane %v220, 4
    %v234 = vrot.slane %v221, 4
    %v235 = vsel %vm232, %v233, %v234
    %v236 = vrot.slane %v222, 4
    %v237 = vsel %vm232, %v234, %v236
    %v238 = vrot.slane %v223, 4
    %v239 = vrot.slane %v224, 4
    %v240 = vsel %vm232, %v238, %v239
    %v241 = vrot.slane %v225, 4
    %v242 = vsel %vm232, %v239, %v241
    %v247 = vadd.f32 %v212, %v235
    %v248 = vadd.f32 %v213, %v237
    %v249 = vadd.f32 %v214, %v240
    %v250 = vadd.f32 %v215, %v242
    %v251 = vld [vmem:[#allocation2] sm:$0x1]
    %v253 = vlaneseq
    %v254 = vshrl.u32 %v253, 7
    %v255 = vsub.s32 0, %v254
    %v256 = vrot.slane %v251, %v255
    %v258 = vadd.f32 %v247, %v256
    %v259 = vadd.f32 %v248, %v256
    %v260 = vadd.f32 %v249, %v256
    %v261 = vadd.f32 %v250, %v256
    %v262 = vmax.f32 %v258, 0.0
    %v263 = vmax.f32 %v259, 0.0
    %v264 = vmax.f32 %v260, 0.0
    %v265 = vmax.f32 %v261, 0.0
    %v270 = vcombine.high %v262, %v262
    %v272 = vunpack.c.l.s4 1983009808
    %v273 = vunpack.c.0.s8 %v272
    %v274 = vlaneseq
    %v275 = vshrl.u32 %v274, 7
    %v276 = vsub.s32 %v273, %v275
    %v277 = vrot.slane %v262, %v276
    %v279 = vunpack.c.l.s4 1983009808
    %v280 = vunpack.c.0.s8 %v279
    %v281 = vlaneseq
    %v282 = vshrl.u32 %v281, 7
    %v283 = vsub.s32 %v280, %v282
    %v284 = vrot.slane %v270, %v283
    %v285 = vcombine.high %v277, %v277
    %v286 = vcombine.high %v284, %v284
    %v287 = vcombine.high %v263, %v263
    %v289 = vunpack.c.l.s4 1983009808
    %v290 = vunpack.c.0.s8 %v289
    %v291 = vlaneseq
    %v292 = vshrl.u32 %v291, 7
    %v293 = vsub.s32 %v290, %v292
    %v294 = vrot.slane %v263, %v293
    %v296 = vunpack.c.l.s4 1983009808
    %v297 = vunpack.c.0.s8 %v296
    %v298 = vlaneseq
    %v299 = vshrl.u32 %v298, 7
    %v300 = vsub.s32 %v297, %v299
    %v301 = vrot.slane %v287, %v300
    %v302 = vcombine.high %v294, %v294
    %v303 = vcombine.high %v301, %v301
    %v304 = vcombine.high %v264, %v264
    %v306 = vunpack.c.l.s4 1983009808
    %v307 = vunpack.c.0.s8 %v306
    %v308 = vlaneseq
    %v309 = vshrl.u32 %v308, 7
    %v310 = vsub.s32 %v307, %v309
    %v311 = vrot.slane %v264, %v310
    %v313 = vunpack.c.l.s4 1983009808
    %v314 = vunpack.c.0.s8 %v313
    %v315 = vlaneseq
    %v316 = vshrl.u32 %v315, 7
    %v317 = vsub.s32 %v314, %v316
    %v318 = vrot.slane %v304, %v317
    %v319 = vcombine.high %v311, %v311
    %v320 = vcombine.high %v318, %v318
    %v321 = vcombine.high %v265, %v265
    %v323 = vunpack.c.l.s4 1983009808
    %v324 = vunpack.c.0.s8 %v323
    %v325 = vlaneseq
    %v326 = vshrl.u32 %v325, 7
    %v327 = vsub.s32 %v324, %v326
    %v328 = vrot.slane %v265, %v327
    %v330 = vunpack.c.l.s4 1983009808
    %v331 = vunpack.c.0.s8 %v330
    %v332 = vlaneseq
    %v333 = vshrl.u32 %v332, 7
    %v334 = vsub.s32 %v331, %v333
    %v335 = vrot.slane %v321, %v334
    %v336 = vcombine.high %v328, %v328
    %v337 = vcombine.high %v335, %v335
    %vm354 = vcmask 123904
    %v355 = vsel %vm354, %v277, -inf
    %v356 = vrot.slane %v355, 4
    %v357 = vmax.f32 %v355, %v356
    %v358 = vrot.slane %v357, 2
    %v359 = vmax.f32 %v357, %v358
    %v360 = vrot.slane %v359, 1
    %v361 = vmax.f32 %v359, %v360
    %v362 = vsel %vm354, %v285, -inf
    %v363 = vrot.slane %v362, 4
    %v364 = vmax.f32 %v362, %v363
    %v365 = vrot.slane %v364, 2
    %v366 = vmax.f32 %v364, %v365
    %v367 = vrot.slane %v366, 1
    %v368 = vmax.f32 %v366, %v367
    %v369 = vsel %vm354, %v284, -inf
    %v370 = vrot.slane %v369, 4
    %v371 = vmax.f32 %v369, %v370
    %v372 = vrot.slane %v371, 2
    %v373 = vmax.f32 %v371, %v372
    %v374 = vrot.slane %v373, 1
    %v375 = vmax.f32 %v373, %v374
    %v376 = vsel %vm354, %v286, -inf
    %v377 = vrot.slane %v376, 4
    %v378 = vmax.f32 %v376, %v377
    %v379 = vrot.slane %v378, 2
    %v380 = vmax.f32 %v378, %v379
    %v381 = vrot.slane %v380, 1
    %v382 = vmax.f32 %v380, %v381
    %v383 = vsel %vm354, %v294, -inf
    %v384 = vrot.slane %v383, 4
    %v385 = vmax.f32 %v383, %v384
    %v386 = vrot.slane %v385, 2
    %v387 = vmax.f32 %v385, %v386
    %v388 = vrot.slane %v387, 1
    %v389 = vmax.f32 %v387, %v388
    %v390 = vsel %vm354, %v302, -inf
    %v391 = vrot.slane %v390, 4
    %v392 = vmax.f32 %v390, %v391
    %v393 = vrot.slane %v392, 2
    %v394 = vmax.f32 %v392, %v393
    %v395 = vrot.slane %v394, 1
    %v396 = vmax.f32 %v394, %v395
    %v397 = vsel %vm354, %v301, -inf
    %v398 = vrot.slane %v397, 4
    %v399 = vmax.f32 %v397, %v398
    %v400 = vrot.slane %v399, 2
    %v401 = vmax.f32 %v399, %v400
    %v402 = vrot.slane %v401, 1
    %v403 = vmax.f32 %v401, %v402
    %v404 = vsel %vm354, %v303, -inf
    %v405 = vrot.slane %v404, 4
    %v406 = vmax.f32 %v404, %v405
    %v407 = vrot.slane %v406, 2
    %v408 = vmax.f32 %v406, %v407
    %v409 = vrot.slane %v408, 1
    %v410 = vmax.f32 %v408, %v409
    %v411 = vsel %vm354, %v311, -inf
    %v412 = vrot.slane %v411, 4
    %v413 = vmax.f32 %v411, %v412
    %v414 = vrot.slane %v413, 2
    %v415 = vmax.f32 %v413, %v414
    %v416 = vrot.slane %v415, 1
    %v417 = vmax.f32 %v415, %v416
    %v418 = vsel %vm354, %v319, -inf
    %v419 = vrot.slane %v418, 4
    %v420 = vmax.f32 %v418, %v419
    %v421 = vrot.slane %v420, 2
    %v422 = vmax.f32 %v420, %v421
    %v423 = vrot.slane %v422, 1
    %v424 = vmax.f32 %v422, %v423
    %v425 = vsel %vm354, %v318, -inf
    %v426 = vrot.slane %v425, 4
    %v427 = vmax.f32 %v425, %v426
    %v428 = vrot.slane %v427, 2
    %v429 = vmax.f32 %v427, %v428
    %v430 = vrot.slane %v429, 1
    %v431 = vmax.f32 %v429, %v430
    %v432 = vsel %vm354, %v320, -inf
    %v433 = vrot.slane %v432, 4
    %v434 = vmax.f32 %v432, %v433
    %v435 = vrot.slane %v434, 2
    %v436 = vmax.f32 %v434, %v435
    %v437 = vrot.slane %v436, 1
    %v438 = vmax.f32 %v436, %v437
    %v439 = vsel %vm354, %v328, -inf
    %v440 = vrot.slane %v439, 4
    %v441 = vmax.f32 %v439, %v440
    %v442 = vrot.slane %v441, 2
    %v443 = vmax.f32 %v441, %v442
    %v444 = vrot.slane %v443, 1
    %v445 = vmax.f32 %v443, %v444
    %v446 = vsel %vm354, %v336, -inf
    %v447 = vrot.slane %v446, 4
    %v448 = vmax.f32 %v446, %v447
    %v449 = vrot.slane %v448, 2
    %v450 = vmax.f32 %v448, %v449
    %v451 = vrot.slane %v450, 1
    %v452 = vmax.f32 %v450, %v451
    %v453 = vsel %vm354, %v335, -inf
    %v454 = vrot.slane %v453, 4
    %v455 = vmax.f32 %v453, %v454
    %v456 = vrot.slane %v455, 2
    %v457 = vmax.f32 %v455, %v456
    %v458 = vrot.slane %v457, 1
    %v459 = vmax.f32 %v457, %v458
    %v460 = vsel %vm354, %v337, -inf
    %v461 = vrot.slane %v460, 4
    %v462 = vmax.f32 %v460, %v461
    %v463 = vrot.slane %v462, 2
    %v464 = vmax.f32 %v462, %v463
    %v465 = vrot.slane %v464, 1
    %v466 = vmax.f32 %v464, %v465
    %vm483 = vcmask 1043459
    %v484 = vsel %vm483, %v368, %v361
    %vm485 = vcmask 1044484
    %v486 = vsel %vm485, %v375, %v484
    %vm487 = vcmask 1045509
    %v488 = vsel %vm487, %v382, %v486
    %vm489 = vcmask 1046534
    %v490 = vsel %vm489, %v389, %v488
    %vm491 = vcmask 1047559
    %v492 = vsel %vm491, %v396, %v490
    %vm493 = vcmask 1041409
    %v494 = vsel %vm493, %v410, %v403
    %v495 = vsel %vm483, %v424, %v417
    %v496 = vsel %vm485, %v431, %v495
    %v497 = vsel %vm487, %v438, %v496
    %v498 = vsel %vm489, %v445, %v497
    %v499 = vsel %vm491, %v452, %v498
    %v500 = vsel %vm493, %v466, %v459
    %vm505 = vcmask 1041408
    %v506 = vsel %vm505, 0.0, %v492
    %v507 = vsel %vm505, 0.0, %v499
    %v508 = vsel %vm505, %v494, 0.0
    %v509 = vsel %vm505, %v500, 0.0
    %v514 = vrot.slane %v506, 1
    %v515 = vrot.slane %v508, 1
    %v516 = vsel %vm127, %v514, %v515
    %v517 = vrot.slane %v507, 1
    %v518 = vrot.slane %v509, 1
    %v519 = vsel %vm127, %v517, %v518
    %520 = vrot.lane.b32.xlu0 %v516, 16
    %v521 = vpop.permute.xlu0 %520
    %522 = vrot.lane.b32.xlu0 %v519, 16
    %v523 = vpop.permute.xlu0 %522
    %v526 = vrot.slane %v506, 2
    %v527 = vrot.slane %v508, 2
    %v528 = vsel %vm162, %v526, %v527
    %v529 = vrot.slane %v507, 2
    %v530 = vrot.slane %v509, 2
    %v531 = vsel %vm162, %v529, %v530
    %532 = vrot.lane.b32.xlu0 %v528, 32
    %v533 = vpop.permute.xlu0 %532
    %534 = vrot.lane.b32.xlu0 %v531, 32
    %v535 = vpop.permute.xlu0 %534
    %v538 = vrot.slane %v506, 3
    %v539 = vrot.slane %v508, 3
    %v540 = vsel %vm197, %v538, %v539
    %v541 = vrot.slane %v507, 3
    %v542 = vrot.slane %v509, 3
    %v543 = vsel %vm197, %v541, %v542
    %544 = vrot.lane.b32.xlu0 %v540, 48
    %v545 = vpop.permute.xlu0 %544
    %546 = vrot.lane.b32.xlu0 %v543, 48
    %v547 = vpop.permute.xlu0 %546
    %v550 = vrot.slane %v506, 4
    %v551 = vrot.slane %v508, 4
    %v552 = vsel %vm232, %v550, %v551
    %v553 = vrot.slane %v507, 4
    %v554 = vrot.slane %v509, 4
    %v555 = vsel %vm232, %v553, %v554
    %556 = vrot.lane.b32.xlu0 %v552, 64
    %v557 = vpop.permute.xlu0 %556
    %558 = vrot.lane.b32.xlu0 %v555, 64
    %v559 = vpop.permute.xlu0 %558
    %vm562 = vcmask 130048
    %v563 = vsel %vm562, %v506, %v521
    %v564 = vsel %vm562, %v507, %v523
    %vm565 = vcmask 261120
    %v566 = vsel %vm565, %v563, %v533
    %v567 = vsel %vm565, %v564, %v535
    %vm568 = vcmask 392192
    %v569 = vsel %vm568, %v566, %v545
    %v570 = vsel %vm568, %v567, %v547
    %vm571 = vcmask 523264
    %v572 = vsel %vm571, %v569, %v557
    %v573 = vsel %vm571, %v570, %v559
    %v574 = vpack.c.bf16 %v573, %v572
    %v575 = vld [vmem:[%s3] sm:$0xf]
    %v576 = vld [vmem:[%s3 + $0x4] sm:$0xf]
    %v577 = vld [vmem:[%s3 + $0x8] sm:$0xf]
    %v578 = vld [vmem:[%s3 + $0xc] sm:$0xf]
    %v579 = vld [vmem:[%s3 + $0x10] sm:$0xf]
    %v580 = vld [vmem:[%s3 + $0x14] sm:$0xf]
    %v581 = vld [vmem:[%s3 + $0x18] sm:$0xf]
    %v582 = vld [vmem:[%s3 + $0x1c] sm:$0xf]
    %v583 = vld [vmem:[%s3 + $0x20] sm:$0xf]
    %v584 = vld [vmem:[%s3 + $0x24] sm:$0xf]
    %v585 = vld [vmem:[#allocation5] sm:$0x1]
    %v587 = vlaneseq
    %v588 = vshrl.u32 %v587, 7
    %v589 = vsub.s32 0, %v588
    %v590 = vrot.slane %v585, %v589
    %v602 = vunpack.c.l.b16 %v575
    %v603 = vunpack.c.l.b16 %v576
    %v604 = vunpack.c.l.b16 %v577
    %v605 = vunpack.c.l.b16 %v578
    %v606 = vunpack.c.l.b16 %v579
    %v607 = vunpack.c.l.b16 %v580
    %v608 = vunpack.c.l.b16 %v581
    %v609 = vunpack.c.l.b16 %v582
    %v610 = vunpack.c.l.b16 %v583
    %v611 = vunpack.c.l.b16 %v584
    %v612 = vpack.c.b16 %v603, %v602
    %v613 = vpack.c.b16 %v605, %v604
    %v614 = vpack.c.b16 %v607, %v606
    %v615 = vpack.c.b16 %v609, %v608
    %v616 = vpack.c.b16 %v611, %v610
    %vm622 = vcmask 654336
    %v624 = vsel %vm622, %v574, 0
    %626 = vmatprep.subr.bf16.mxu0 0
    %627 = vmatpush1.bf16.msra.mxu0 %v612
    %628 = vmatprep.subr.bf16.mxu0 0
    %629 = vmatpush1.bf16.msra.mxu0 %v613
    %630 = vmatprep.subr.bf16.mxu0 0
    %631 = vmatpush1.bf16.msra.mxu0 %v614
    %632 = vmatprep.subr.bf16.mxu0 0
    %633 = vmatpush1.bf16.msra.mxu0 %v615
    %634 = vmatprep.subr.bf16.mxu0 0
    %635 = vmatpush1.bf16.msra.mxu0 %v616
    %636 = vmatprep.subr.bf16.mxu0 0
    %637 = vmatpush1.bf16.msra.mxu0 0
    %638 = vmatprep.subr.bf16.mxu0 0
    %639 = vmatpush1.bf16.msra.mxu0 0
    %640 = vmatprep.subr.bf16.mxu0 0
    %641 = vmatpush1.bf16.msra.mxu0 0
    %642 = vmatprep.subr.bf16.mxu0 0
    %643 = vmatpush1.bf16.msra.mxu0 0
    %644 = vmatprep.subr.bf16.mxu0 0
    %645 = vmatpush1.bf16.msra.mxu0 0
    %646 = vmatprep.subr.bf16.mxu0 0
    %647 = vmatpush1.bf16.msra.mxu0 0
    %648 = vmatprep.subr.bf16.mxu0 0
    %649 = vmatpush1.bf16.msra.mxu0 0
    %650 = vmatprep.subr.bf16.mxu0 0
    %651 = vmatpush1.bf16.msra.mxu0 0
    %652 = vmatprep.subr.bf16.mxu0 0
    %653 = vmatpush1.bf16.msra.mxu0 0
    %654 = vmatprep.subr.bf16.mxu0 0
    %655 = vmatpush1.bf16.msra.mxu0 0
    %656 = vmatprep.subr.bf16.mxu0 0
    %657 = vmatpush1.bf16.msra.mxu0 0
    %658 = vmatprep.mubr.bf16.mxu0 0
    %659 = vmatmul.mubr.bf16.gmra.mrb[0].mxu0 %v624
    %v660 = vpop.f32.mrb[0].mxu0
    %v661 = vadd.f32 %v590, %v660
    %v662 = vpop.f32.mrb[0].mxu0
    %v663 = vpop.f32.mrb[0].mxu0
    %v664 = vadd.f32 %v590, %v663
    %v665 = vpop.f32.mrb[0].mxu0
    %666 = vdwg.mxu0
    %v667 = vmax.f32 %v661, 0.0
    %v668 = vmax.f32 %v664, 0.0
    %v671 = vcombine.high %v667, %v667
    %v673 = vunpack.c.l.s4 1983009808
    %v674 = vunpack.c.0.s8 %v673
    %v675 = vlaneseq
    %v676 = vshrl.u32 %v675, 7
    %v677 = vsub.s32 %v674, %v676
    %v678 = vrot.slane %v667, %v677
    %v680 = vunpack.c.l.s4 1983009808
    %v681 = vunpack.c.0.s8 %v680
    %v682 = vlaneseq
    %v683 = vshrl.u32 %v682, 7
    %v684 = vsub.s32 %v681, %v683
    %v685 = vrot.slane %v671, %v684
    %v686 = vcombine.high %v678, %v678
    %v687 = vcombine.high %v685, %v685
    %v688 = vcombine.high %v668, %v668
    %v690 = vunpack.c.l.s4 1983009808
    %v691 = vunpack.c.0.s8 %v690
    %v692 = vlaneseq
    %v693 = vshrl.u32 %v692, 7
    %v694 = vsub.s32 %v691, %v693
    %v695 = vrot.slane %v668, %v694
    %v697 = vunpack.c.l.s4 1983009808
    %v698 = vunpack.c.0.s8 %v697
    %v699 = vlaneseq
    %v700 = vshrl.u32 %v699, 7
    %v701 = vsub.s32 %v698, %v700
    %v702 = vrot.slane %v688, %v701
    %v703 = vcombine.high %v695, %v695
    %v704 = vcombine.high %v702, %v702
    %vm713 = vcmask 254976
    %v714 = vsel %vm713, %v678, -inf
    %v715 = vrot.slane %v714, 4
    %v716 = vmax.f32 %v714, %v715
    %v717 = vrot.slane %v716, 2
    %v718 = vmax.f32 %v716, %v717
    %v719 = vrot.slane %v718, 1
    %v720 = vmax.f32 %v718, %v719
    %v721 = vsel %vm713, %v686, -inf
    %v722 = vrot.slane %v721, 4
    %v723 = vmax.f32 %v721, %v722
    %v724 = vrot.slane %v723, 2
    %v725 = vmax.f32 %v723, %v724
    %v726 = vrot.slane %v725, 1
    %v727 = vmax.f32 %v725, %v726
    %v728 = vsel %vm713, %v685, -inf
    %v729 = vrot.slane %v728, 4
    %v730 = vmax.f32 %v728, %v729
    %v731 = vrot.slane %v730, 2
    %v732 = vmax.f32 %v730, %v731
    %v733 = vrot.slane %v732, 1
    %v734 = vmax.f32 %v732, %v733
    %v735 = vsel %vm713, %v687, -inf
    %v736 = vrot.slane %v735, 4
    %v737 = vmax.f32 %v735, %v736
    %v738 = vrot.slane %v737, 2
    %v739 = vmax.f32 %v737, %v738
    %v740 = vrot.slane %v739, 1
    %v741 = vmax.f32 %v739, %v740
    %v742 = vsel %vm713, %v695, -inf
    %v743 = vrot.slane %v742, 4
    %v744 = vmax.f32 %v742, %v743
    %v745 = vrot.slane %v744, 2
    %v746 = vmax.f32 %v744, %v745
    %v747 = vrot.slane %v746, 1
    %v748 = vmax.f32 %v746, %v747
    %v749 = vsel %vm713, %v703, -inf
    %v750 = vrot.slane %v749, 4
    %v751 = vmax.f32 %v749, %v750
    %v752 = vrot.slane %v751, 2
    %v753 = vmax.f32 %v751, %v752
    %v754 = vrot.slane %v753, 1
    %v755 = vmax.f32 %v753, %v754
    %v756 = vsel %vm713, %v702, -inf
    %v757 = vrot.slane %v756, 4
    %v758 = vmax.f32 %v756, %v757
    %v759 = vrot.slane %v758, 2
    %v760 = vmax.f32 %v758, %v759
    %v761 = vrot.slane %v760, 1
    %v762 = vmax.f32 %v760, %v761
    %v763 = vsel %vm713, %v704, -inf
    %v764 = vrot.slane %v763, 4
    %v765 = vmax.f32 %v763, %v764
    %v766 = vrot.slane %v765, 2
    %v767 = vmax.f32 %v765, %v766
    %v768 = vrot.slane %v767, 1
    %v769 = vmax.f32 %v767, %v768
    %v778 = vsel %vm493, %v727, %v720
    %vm779 = vcmask 1042434
    %v780 = vsel %vm779, %v734, %v778
    %v781 = vsel %vm483, %v741, %v780
    %v782 = vsel %vm493, %v755, %v748
    %v783 = vsel %vm779, %v762, %v782
    %v784 = vsel %vm483, %v769, %v783
    %v787 = vunpack.c.l.s4 1983009808
    %v788 = vunpack.c.0.s8 %v787
    %v789 = vlaneseq
    %v790 = vshrl.u32 %v789, 7
    %v791 = vsub.s32 %v788, %v790
    %v792 = vrot.slane %v781, %v791
    %v795 = vunpack.c.l.s4 1983009808
    %v796 = vunpack.c.0.s8 %v795
    %v797 = vlaneseq
    %v798 = vshrl.u32 %v797, 7
    %v799 = vsub.s32 %v796, %v798
    %v800 = vrot.slane %v784, %v799
    %v801 = vcombine.low %v792, %v800
    %v802 = vcombine.high %v792, %v800
    %v804 = vunpack.c.l.s4 1934713408
    %v805 = vunpack.c.0.s8 %v804
    %v806 = vlaneseq
    %v807 = vshrl.u32 %v806, 7
    %v808 = vsub.s32 %v805, %v807
    %v809 = vrot.slane %v801, %v808
    %v811 = vunpack.c.l.s4 1934713408
    %v812 = vunpack.c.0.s8 %v811
    %v813 = vlaneseq
    %v814 = vshrl.u32 %v813, 7
    %v815 = vsub.s32 %v812, %v814
    %v816 = vrot.slane %v802, %v815
    %v817 = vcombine.high %v809, 0.0
    %v818 = vcombine.high %v816, 0.0
    %820 = vrot.lane.b32.xlu0 %v817, 32
    %v821 = vpop.permute.xlu0 %820
    %824 = vrot.lane.b32.xlu0 %v816, 64
    %v825 = vpop.permute.xlu0 %824
    %828 = vrot.lane.b32.xlu0 %v818, 96
    %v829 = vpop.permute.xlu0 %828
    %v831 = vsel %vm565, %v809, %v821
    %v832 = vsel %vm571, %v831, %v825
    %vm833 = vcmask 785408
    %v834 = vsel %vm833, %v832, %v829
    %v835 = vpack.c.bf16 %v834, %v834
    %v836 = vld [vmem:[%s5] sm:$0xf]
    %v837 = vld [vmem:[%s5 + $0x4] sm:$0xf]
    %v838 = vld [vmem:[%s5 + $0x8] sm:$0xf]
    %v839 = vld [vmem:[%s5 + $0xc] sm:$0xf]
    %v840 = vld [vmem:[%s5 + $0x10] sm:$0xf]
    %v841 = vld [vmem:[%s5 + $0x14] sm:$0xf]
    %v842 = vld [vmem:[%s5 + $0x18] sm:$0xf]
    %v843 = vld [vmem:[%s5 + $0x1c] sm:$0xf]
    %v844 = vld [vmem:[%s5 + $0x20] sm:$0xf]
    %v845 = vld [vmem:[%s5 + $0x24] sm:$0xf]
    %v846 = vld [vmem:[%s5 + $0x28] sm:$0xf]
    %v847 = vld [vmem:[%s5 + $0x2c] sm:$0xf]
    %v848 = vld [vmem:[%s5 + $0x30] sm:$0xf]
    %v849 = vld [vmem:[%s5 + $0x34] sm:$0xf]
    %v850 = vld [vmem:[%s5 + $0x38] sm:$0xf]
    %v851 = vld [vmem:[%s5 + $0x3c] sm:$0xf]
    %v852 = vld [vmem:[%s6] sm:$0x1]
    %v854 = vlaneseq
    %v855 = vshrl.u32 %v854, 7
    %v856 = vsub.s32 0, %v855
    %v857 = vrot.slane %v852, %v856
    %v875 = vunpack.c.l.b16 %v836
    %v876 = vunpack.c.l.b16 %v837
    %v877 = vunpack.c.l.b16 %v838
    %v878 = vunpack.c.l.b16 %v839
    %v879 = vunpack.c.l.b16 %v840
    %v880 = vunpack.c.l.b16 %v841
    %v881 = vunpack.c.l.b16 %v842
    %v882 = vunpack.c.l.b16 %v843
    %v883 = vunpack.c.l.b16 %v844
    %v884 = vunpack.c.l.b16 %v845
    %v885 = vunpack.c.l.b16 %v846
    %v886 = vunpack.c.l.b16 %v847
    %v887 = vunpack.c.l.b16 %v848
    %v888 = vunpack.c.l.b16 %v849
    %v889 = vunpack.c.l.b16 %v850
    %v890 = vunpack.c.l.b16 %v851
    %v891 = vpack.c.b16 %v876, %v875
    %v892 = vpack.c.b16 %v878, %v877
    %v893 = vpack.c.b16 %v880, %v879
    %v894 = vpack.c.b16 %v882, %v881
    %v895 = vpack.c.b16 %v884, %v883
    %v896 = vpack.c.b16 %v886, %v885
    %v897 = vpack.c.b16 %v888, %v887
    %v898 = vpack.c.b16 %v890, %v889
    %907 = vmatprep.subr.bf16.mxu0 0
    %908 = vmatpush1.bf16.msra.mxu0 %v891
    %909 = vmatprep.subr.bf16.mxu0 0
    %910 = vmatpush1.bf16.msra.mxu0 %v892
    %911 = vmatprep.subr.bf16.mxu0 0
    %912 = vmatpush1.bf16.msra.mxu0 %v893
    %913 = vmatprep.subr.bf16.mxu0 0
    %914 = vmatpush1.bf16.msra.mxu0 %v894
    %915 = vmatprep.subr.bf16.mxu0 0
    %916 = vmatpush1.bf16.msra.mxu0 %v895
    %917 = vmatprep.subr.bf16.mxu0 0
    %918 = vmatpush1.bf16.msra.mxu0 %v896
    %919 = vmatprep.subr.bf16.mxu0 0
    %920 = vmatpush1.bf16.msra.mxu0 %v897
    %921 = vmatprep.subr.bf16.mxu0 0
    %922 = vmatpush1.bf16.msra.mxu0 %v898
    %923 = vmatprep.subr.bf16.mxu0 0
    %924 = vmatpush1.bf16.msra.mxu0 0
    %925 = vmatprep.subr.bf16.mxu0 0
    %926 = vmatpush1.bf16.msra.mxu0 0
    %927 = vmatprep.subr.bf16.mxu0 0
    %928 = vmatpush1.bf16.msra.mxu0 0
    %929 = vmatprep.subr.bf16.mxu0 0
    %930 = vmatpush1.bf16.msra.mxu0 0
    %931 = vmatprep.subr.bf16.mxu0 0
    %932 = vmatpush1.bf16.msra.mxu0 0
    %933 = vmatprep.subr.bf16.mxu0 0
    %934 = vmatpush1.bf16.msra.mxu0 0
    %935 = vmatprep.subr.bf16.mxu0 0
    %936 = vmatpush1.bf16.msra.mxu0 0
    %937 = vmatprep.subr.bf16.mxu0 0
    %938 = vmatpush1.bf16.msra.mxu0 0
    %939 = vmatprep.mubr.bf16.mxu0 0
    %940 = vmatmul.mubr.bf16.gmra.mrb[0].mxu0 %v835
    %v941 = vpop.f32.mrb[0].mxu0
    %v942 = vadd.f32 %v857, %v941
    %v943 = vpop.f32.mrb[0].mxu0
    %v944 = vpop.f32.mrb[0].mxu0
    %v945 = vpop.f32.mrb[0].mxu0
    %946 = vdwg.mxu0
    %v947 = vmax.f32 %v942, 0.0
    %v948 = vpack.c.bf16 %v947, %v947
    %v949 = vld [vmem:[#allocation7] sm:$0xf]
    %v950 = vld [vmem:[#allocation7 + $0x4] sm:$0xf]
    %v951 = vld [vmem:[#allocation7 + $0x8] sm:$0xf]
    %v952 = vld [vmem:[#allocation7 + $0xc] sm:$0xf]
    %v953 = vld [vmem:[#allocation7 + $0x10] sm:$0xf]
    %v954 = vld [vmem:[#allocation7 + $0x14] sm:$0xf]
    %v955 = vld [vmem:[#allocation7 + $0x18] sm:$0xf]
    %v956 = vld [vmem:[#allocation7 + $0x1c] sm:$0xf]
    %v957 = vld [vmem:[#allocation7 + $0x20] sm:$0xf]
    %v958 = vld [vmem:[#allocation7 + $0x24] sm:$0xf]
    %v959 = vld [vmem:[#allocation7 + $0x28] sm:$0xf]
    %v960 = vld [vmem:[#allocation7 + $0x2c] sm:$0xf]
    %v961 = vld [vmem:[#allocation7 + $0x30] sm:$0xf]
    %v962 = vld [vmem:[#allocation7 + $0x34] sm:$0xf]
    %v963 = vld [vmem:[#allocation7 + $0x38] sm:$0xf]
    %v964 = vld [vmem:[#allocation7 + $0x3c] sm:$0xf]
    %v965 = vld [vmem:[%s8] sm:$0x1]
    %v967 = vlaneseq
    %v968 = vshrl.u32 %v967, 7
    %v969 = vsub.s32 0, %v968
    %v970 = vrot.slane %v965, %v969
    %v988 = vunpack.c.l.b16 %v949
    %v989 = vunpack.c.l.b16 %v950
    %v990 = vunpack.c.l.b16 %v951
    %v991 = vunpack.c.l.b16 %v952
    %v992 = vunpack.c.l.b16 %v953
    %v993 = vunpack.c.l.b16 %v954
    %v994 = vunpack.c.l.b16 %v955
    %v995 = vunpack.c.l.b16 %v956
    %v996 = vunpack.c.l.b16 %v957
    %v997 = vunpack.c.l.b16 %v958
    %v998 = vunpack.c.l.b16 %v959
    %v999 = vunpack.c.l.b16 %v960
    %v1000 = vunpack.c.l.b16 %v961
    %v1001 = vunpack.c.l.b16 %v962
    %v1002 = vunpack.c.l.b16 %v963
    %v1003 = vunpack.c.l.b16 %v964
    %v1004 = vpack.c.b16 %v989, %v988
    %v1005 = vpack.c.b16 %v991, %v990
    %v1006 = vpack.c.b16 %v993, %v992
    %v1007 = vpack.c.b16 %v995, %v994
    %v1008 = vpack.c.b16 %v997, %v996
    %v1009 = vpack.c.b16 %v999, %v998
    %v1010 = vpack.c.b16 %v1001, %v1000
    %v1011 = vpack.c.b16 %v1003, %v1002
    %1020 = vmatprep.subr.bf16.mxu0 0
    %1021 = vmatpush1.bf16.msra.mxu0 %v1004
    %1022 = vmatprep.subr.bf16.mxu0 0
    %1023 = vmatpush1.bf16.msra.mxu0 %v1005
    %1024 = vmatprep.subr.bf16.mxu0 0
    %1025 = vmatpush1.bf16.msra.mxu0 %v1006
    %1026 = vmatprep.subr.bf16.mxu0 0
    %1027 = vmatpush1.bf16.msra.mxu0 %v1007
    %1028 = vmatprep.subr.bf16.mxu0 0
    %1029 = vmatpush1.bf16.msra.mxu0 %v1008
    %1030 = vmatprep.subr.bf16.mxu0 0
    %1031 = vmatpush1.bf16.msra.mxu0 %v1009
    %1032 = vmatprep.subr.bf16.mxu0 0
    %1033 = vmatpush1.bf16.msra.mxu0 %v1010
    %1034 = vmatprep.subr.bf16.mxu0 0
    %1035 = vmatpush1.bf16.msra.mxu0 %v1011
    %1036 = vmatprep.subr.bf16.mxu0 0
    %1037 = vmatpush1.bf16.msra.mxu0 0
    %1038 = vmatprep.subr.bf16.mxu0 0
    %1039 = vmatpush1.bf16.msra.mxu0 0
    %1040 = vmatprep.subr.bf16.mxu0 0
    %1041 = vmatpush1.bf16.msra.mxu0 0
    %1042 = vmatprep.subr.bf16.mxu0 0
    %1043 = vmatpush1.bf16.msra.mxu0 0
    %1044 = vmatprep.subr.bf16.mxu0 0
    %1045 = vmatpush1.bf16.msra.mxu0 0
    %1046 = vmatprep.subr.bf16.mxu0 0
    %1047 = vmatpush1.bf16.msra.mxu0 0
    %1048 = vmatprep.subr.bf16.mxu0 0
    %1049 = vmatpush1.bf16.msra.mxu0 0
    %1050 = vmatprep.subr.bf16.mxu0 0
    %1051 = vmatpush1.bf16.msra.mxu0 0
    %1052 = vmatprep.mubr.bf16.mxu0 0
    %1053 = vmatmul.mubr.bf16.gmra.mrb[0].mxu0 %v948
    %v1054 = vpop.f32.mrb[0].mxu0
    %v1055 = vadd.f32 %v970, %v1054
    %v1056 = vpop.f32.mrb[0].mxu0
    %v1057 = vpop.f32.mrb[0].mxu0
    %v1058 = vpop.f32.mrb[0].mxu0
    %1059 = vdwg.mxu0
    %1060 = vst [vmem:[#allocation8] sm:$0x3] %v1055
    // Predicated region
    $region50: #{tpu_custom_call.1} parent=1 // pred_check
      _
    $region51: #{tpu_custom_call.1} parent=1 // pred_check_branch
      %1062 = sbr.rel (0) target = $region53
    $region52: #{tpu_custom_call.1} parent=1 // pred_region
      %s1064 = ssub.s32 32, 32
      %1065 = vsyncadd [#allocation4], %s1064
      %s1067 = sshll.u32 [#allocation8], 4
      %s1068 = int_to_ptr.vmem [resolvable:$true] %s1067
      %1070 = dma.vmem_to_hbm [thread:$0]  %s1068, 32, %s9, [#allocation4]
    $region53: #{tpu_custom_call.1} parent=1 // pred_fallthru
      _
    // Predicated region
    $region54: #{tpu_custom_call.1} parent=1 // pred_check
      _
    $region55: #{tpu_custom_call.1} parent=1 // pred_check_branch
      %1072 = sbr.rel (0) target = $region57
    $region56: #{tpu_custom_call.1} parent=1 // pred_region
      %1073 = dma.done [#allocation4], 32
    $region57: #{tpu_custom_call.1} parent=1 // pred_fallthru
      _
    %1074 = vsyncpa [#allocation3], 1
    %1075 = vsyncpa [#allocation6], 1
    %1076 = vsyncpa [#allocation4], 1

</llo_original>
